<compile_context>
chip_gen: v6e
topology: v6e:2x2x1
jax: 0.10.0
libtpu: 0.0.40
codegen_flags: <defaults>
</compile_context>

<pallas_src>
import functools

import jax
import jax.numpy as jnp
from jax.experimental import pallas as pl
from jax.experimental.pallas import tpu as pltpu


def _round_up(x, m):
    return -(-x // m) * m


def _make_htne_kernel(H, rh, rm):
    """Builds the kernel with static aux-slab row offsets.

    aux layout (f32, sublane-aligned):
      row 0        : delta
      row 1        : t_times
      rows rh..rh+H: h_times
      rows rm..rm+H: h_time_mask
    """

    def htne_kernel(src_ref, tar_ref, h_ref, n_ref, aux_ref, loss_ref):
        f32 = jnp.float32
        src = src_ref[...].astype(f32)          # [E, TB]
        tar = tar_ref[...].astype(f32)          # [E, TB]
        h = h_ref[...].astype(f32)              # [E, H, TB]
        n = n_ref[...].astype(f32)              # [E, N, TB]

        delta = aux_ref[0:1, :]                 # [1, TB]
        t_t = aux_ref[1:2, :]                   # [1, TB]
        h_t = aux_ref[rh:rh + H, :]             # [H, TB]
        mask = aux_ref[rm:rm + H, :]            # [H, TB]

        s3 = src[:, None, :]                    # [E, 1, TB]
        t3 = tar[:, None, :]                    # [E, 1, TB]

        # Squared norms / inner products. E is the leading axis -> the sums
        # below are plain VPU accumulations over full-lane vregs.
        ss = jnp.sum(src * src, axis=0, keepdims=True)     # [1, TB]
        tt = jnp.sum(tar * tar, axis=0, keepdims=True)     # [1, TB]
        st = jnp.sum(src * tar, axis=0, keepdims=True)     # [1, TB]
        hh = jnp.sum(h * h, axis=0)                         # [H, TB]
        nn_ = jnp.sum(n * n, axis=0)                        # [N, TB]
        sh = jnp.sum(s3 * h, axis=0)                        # [H, TB]
        ht = jnp.sum(h * t3, axis=0)                        # [H, TB]
        sn = jnp.sum(s3 * n, axis=0)                        # [N, TB]

        # att = softmax_h(-||src - h||^2) via the distance expansion.
        att_logits = 2.0 * sh - ss - hh                     # [H, TB]
        att_max = jnp.max(att_logits, axis=0, keepdims=True)
        att_exp = jnp.exp(att_logits - att_max)
        denom = jnp.sum(att_exp, axis=0, keepdims=True)
        att = att_exp * pl.reciprocal(denom, approx=True)   # [H, TB]

        # History weights: att * mask * exp(delta * |t - t_h|).
        d_time = jnp.abs(t_t - h_t)                          # [H, TB]
        w = att * mask * jnp.exp(delta * d_time)             # [H, TB]

        # p_mu, p_alpha, n_mu via the same expansion.
        p_mu = 2.0 * st - ss - tt                            # [1, TB]
        p_alpha = 2.0 * ht - hh - tt                         # [H, TB]
        n_mu = 2.0 * sn - ss - nn_                           # [N, TB]

        p_lambda = p_mu + jnp.sum(w * p_alpha, axis=0, keepdims=True)  # [1, TB]

        # n_lambda fold:
        #   sum_h w_h * (2 h_h.n_k - ||h_h||^2 - ||n_k||^2)
        # = 2 (sum_h w_h h_h).n_k - (sum_h w_h ||h_h||^2) - (sum_h w_h) ||n_k||^2
        wh = jnp.sum(w[None, :, :] * h, axis=1)              # [E, TB]
        wn = jnp.sum(wh[:, None, :] * n, axis=0)             # [N, TB]
        whh = jnp.sum(w * hh, axis=0, keepdims=True)         # [1, TB]
        wsum = jnp.sum(w, axis=0, keepdims=True)             # [1, TB]
        n_lambda = n_mu + 2.0 * wn - whh - wsum * nn_        # [N, TB]

        # HTNE loss (keep the +1e-6 eps form for parity with the module).
        eps = 1e-6
        pos_loss = -jnp.log(jax.nn.sigmoid(p_lambda) + eps)            # [1, TB]
        neg_loss = jnp.sum(jnp.log(jax.nn.sigmoid(-n_lambda) + eps),
                           axis=0, keepdims=True)                      # [1, TB]
        loss_ref[...] = pos_loss - neg_loss                            # [1, TB]

    return htne_kernel


def htne_forward_pallas(node_emb_w, delta_w, s_nodes, t_nodes, t_times,
                        h_nodes, h_times, h_time_mask, n_nodes,
                        *, tb_max=512, emb_dtype=jnp.bfloat16):
    """Returns loss of shape [B], matching the PyTorch module (new=False)."""
    B, H = h_nodes.shape
    N = n_nodes.shape[1]
    E = node_emb_w.shape[1]

    # Batch tile: batch is the lane axis -> multiple of 128.  Big enough to
    # amortize per-step overhead, small enough to keep >= 2 grid steps for
    # larger batches (so the "parallel" axis shards across v7x's 2 TCs).
    B128 = _round_up(B, 128)
    if B128 <= 128:
        TB = B128
    else:
        TB = min(tb_max, _round_up(B128 // 2, 128))
    B_pad = _round_up(B, TB)
    pad = B_pad - B

    if pad:
        pad_rows = lambda a: jnp.pad(a, ((0, pad), (0, 0)))
        s_nodes = pad_rows(s_nodes)
        t_nodes = pad_rows(t_nodes)
        t_times = pad_rows(t_times)
        h_nodes = pad_rows(h_nodes)
        h_times = pad_rows(h_times)
        h_time_mask = pad_rows(h_time_mask)   # zero mask -> padded rows inert
        n_nodes = pad_rows(n_nodes)

    # Embedding gathers + transpose to batch-minor layout (XLA glue).
    # TODO(synk): fuse these gathers into the kernel (VMEM-resident table)
    # to remove the HBM round-trip of the gathered slabs.
    src_T = node_emb_w[s_nodes[:, 0]].T.astype(emb_dtype)                  # [E, B_pad]
    tar_T = node_emb_w[t_nodes[:, 0]].T.astype(emb_dtype)                  # [E, B_pad]
    h_T = jnp.transpose(node_emb_w[h_nodes], (2, 1, 0)).astype(emb_dtype)  # [E, H, B_pad]
    n_T = jnp.transpose(node_emb_w[n_nodes], (2, 1, 0)).astype(emb_dtype)  # [E, N, B_pad]

    # Pack the small per-row operands into one sublane-aligned f32 slab.
    Hp = _round_up(H, 8)
    rh, rm = 8, 8 + Hp
    aux = jnp.zeros((8 + 2 * Hp, B_pad), jnp.float32)
    aux = aux.at[0, :].set(delta_w[s_nodes[:, 0], 0].astype(jnp.float32))
    aux = aux.at[1, :].set(t_times[:, 0].astype(jnp.float32))
    aux = aux.at[rh:rh + H, :].set(h_times.T.astype(jnp.float32))
    aux = aux.at[rm:rm + H, :].set(h_time_mask.T.astype(jnp.float32))

    grid = (B_pad // TB,)

    # VMEM budget: pipeline buffers (2x block bytes) + f32 working set, with
    # a comfortable floor; well under v7x's 64 MiB physical VMEM.
    emb_bytes = jnp.dtype(emb_dtype).itemsize
    block_bytes = ((2 * E + E * (H + N)) * TB * emb_bytes
                   + (8 + 2 * Hp) * TB * 4 + TB * 4)
    f32_work = (2 * E + E * (H + N)) * TB * 4
    vmem_limit = int(min(96 << 20, max(24 << 20, 2 * block_bytes + 6 * f32_work)))

    kernel = _make_htne_kernel(H, rh, rm)

    loss = pl.pallas_call(
        kernel,
        out_shape=jax.ShapeDtypeStruct((1, B_pad), jnp.float32),
        grid=grid,
        in_specs=[
            pl.BlockSpec((E, TB), lambda i: (0, i)),             # src_T
            pl.BlockSpec((E, TB), lambda i: (0, i)),             # tar_T
            pl.BlockSpec((E, H, TB), lambda i: (0, 0, i)),       # h_T
            pl.BlockSpec((E, N, TB), lambda i: (0, 0, i)),       # n_T
            pl.BlockSpec((8 + 2 * Hp, TB), lambda i: (0, i)),    # aux
        ],
        out_specs=pl.BlockSpec((1, TB), lambda i: (0, i)),
        compiler_params=pltpu.CompilerParams(
            dimension_semantics=("parallel",),
            vmem_limit_bytes=vmem_limit),
    )(src_T, tar_T, h_T, n_T, aux)

    return loss[0, :B]


def htne_forward_ref(node_emb_w, delta_w, s_nodes, t_nodes, t_times,
                     h_nodes, h_times, h_time_mask, n_nodes):
    """Pure-JAX reference, literal transcription of the PyTorch forward."""
    src_emb = node_emb_w[s_nodes]                  # [B, 1, E]
    h_emb = node_emb_w[h_nodes]                    # [B, H, E]
    delta = delta_w[s_nodes][:, :, 0]              # [B, 1]
    d_time = jnp.abs(t_times - h_times)            # [B, H]

    tar_emb = node_emb_w[t_nodes]                  # [B, 1, E]
    n_emb = node_emb_w[n_nodes]                    # [B, N, E]
    att = jax.nn.softmax(-jnp.sum((src_emb - h_emb) ** 2, axis=2), axis=1)
    p_mu = -jnp.sum((src_emb - tar_emb) ** 2, axis=2)[:, 0]
    p_alpha = -jnp.sum((h_emb - tar_emb) ** 2, axis=2)
    n_mu = -jnp.sum((src_emb - n_emb) ** 2, axis=2)
    n_alpha = -jnp.sum((h_emb[:, :, None, :] - n_emb[:, None, :, :]) ** 2, axis=3)

    p_lambda = p_mu + jnp.sum(
        att * h_time_mask * p_alpha * jnp.exp(delta * d_time), axis=1)
    n_lambda = n_mu + jnp.sum(
        (att * h_time_mask)[:, :, None] * n_alpha
        * jnp.exp(delta * d_time)[:, :, None], axis=1)

    pos_loss = -jnp.log(jax.nn.sigmoid(p_lambda) + 1e-6)
    neg_loss = jnp.sum(jnp.log(jax.nn.sigmoid(-n_lambda) + 1e-6), axis=1)
    return pos_loss - neg_loss


if __name__ == "__main__":
    emb_size, node_dim = 32, 64    # embedding size, number of nodes
    H, N = 8, 8                    # history length, negative samples

    key = jax.random.PRNGKey(0)
    k = jax.random.split(key, 4)

    # Deterministic parameter init matching the module's __init__.
    node_emb_w = jax.random.uniform(
        k[0], (node_dim, emb_size), dtype=jnp.float32,
        minval=-1.0 / emb_size, maxval=1.0 / emb_size)
    delta_w = jnp.ones((node_dim, 1), jnp.float32)

    def make_inputs(subkey, B):
        kk = jax.random.split(subkey, 7)
        s_nodes = jax.random.randint(kk[0], (B, 1), 0, node_dim)
        t_nodes = jax.random.randint(kk[1], (B, 1), 0, node_dim)
        t_times = jax.random.uniform(kk[2], (B, 1), dtype=jnp.float32)
        h_nodes = jax.random.randint(kk[3], (B, H), 0, node_dim)
        h_times = jax.random.uniform(kk[4], (B, H), dtype=jnp.float32)
        h_time_mask = (jax.random.uniform(kk[5], (B, H)) > 0.3).astype(jnp.float32)
        n_nodes = jax.random.randint(kk[6], (B, N), 0, node_dim)
        return s_nodes, t_nodes, t_times, h_nodes, h_times, h_time_mask, n_nodes

    # Small batch (single tile), and a batch that exercises tiling + padding
    # + the >=2 grid-step path; f32 (tight parity) and bf16 (DMA-light) paths.
    cases = (
        (8, k[1], jnp.float32, 2e-3, 1e-3),
        (300, k[2], jnp.float32, 2e-3, 1e-3),
        (300, k[2], jnp.bfloat16, 3e-2, 3e-2),
    )
    for B, sub, emb_dtype, rtol, atol in cases:
        inputs = make_inputs(sub, B)
        loss = htne_forward_pallas(node_emb_w, delta_w, *inputs,
                                   emb_dtype=emb_dtype)
        loss = jax.block_until_ready(loss)
        ref = htne_forward_ref(node_emb_w, delta_w, *inputs)
        assert loss.shape == (B,), (B, loss.shape)
        assert jnp.allclose(loss, ref, rtol=rtol, atol=atol), (
            B, emb_dtype, loss, ref)

    print("KERNEL_OK")
</pallas_src>

<mosaic_0001>
module attributes {stable_mosaic.version = 11 : i64} {
  func.func @htne_kernel(%arg0: i32, %arg1: memref<32x128xf32, #tpu.memory_space<vmem>>, %arg2: memref<32x128xf32, #tpu.memory_space<vmem>>, %arg3: memref<32x8x128xf32, #tpu.memory_space<vmem>>, %arg4: memref<32x8x128xf32, #tpu.memory_space<vmem>>, %arg5: memref<24x128xf32, #tpu.memory_space<vmem>>, %arg6: memref<1x128xf32, #tpu.memory_space<vmem>>) attributes {dimension_semantics = [#tpu.dimension_semantics<parallel>], iteration_bounds = array<i64: 1>, scalar_prefetch = 0 : i64, scratch_operands = 0 : i64, tpu.core_type = #tpu.core_type<tc>, window_params = [{transform_indices = @transform_0, window_bounds = array<i64: 32, 128>}, {transform_indices = @transform_1, window_bounds = array<i64: 32, 128>}, {transform_indices = @transform_2, window_bounds = array<i64: 32, 8, 128>}, {transform_indices = @transform_3, window_bounds = array<i64: 32, 8, 128>}, {transform_indices = @transform_4, window_bounds = array<i64: 24, 128>}, {transform_indices = @transform_5, window_bounds = array<i64: 1, 128>}]} {
    %c0 = arith.constant 0 : index
    %c0_0 = arith.constant 0 : index
    %0 = vector.load %arg1[%c0, %c0_0] : memref<32x128xf32, #tpu.memory_space<vmem>>, vector<32x128xf32>
    %c0_1 = arith.constant 0 : index
    %c0_2 = arith.constant 0 : index
    %1 = vector.load %arg2[%c0_1, %c0_2] : memref<32x128xf32, #tpu.memory_space<vmem>>, vector<32x128xf32>
    %c0_3 = arith.constant 0 : index
    %c0_4 = arith.constant 0 : index
    %c0_5 = arith.constant 0 : index
    %2 = vector.load %arg3[%c0_3, %c0_4, %c0_5] : memref<32x8x128xf32, #tpu.memory_space<vmem>>, vector<32x8x128xf32>
    %c0_6 = arith.constant 0 : index
    %c0_7 = arith.constant 0 : index
    %c0_8 = arith.constant 0 : index
    %3 = vector.load %arg4[%c0_6, %c0_7, %c0_8] : memref<32x8x128xf32, #tpu.memory_space<vmem>>, vector<32x8x128xf32>
    %c0_9 = arith.constant 0 : index
    %c0_10 = arith.constant 0 : index
    %4 = vector.load %arg5[%c0_9, %c0_10] : memref<24x128xf32, #tpu.memory_space<vmem>>, vector<1x128xf32>
    %c1 = arith.constant 1 : index
    %c0_11 = arith.constant 0 : index
    %5 = vector.load %arg5[%c1, %c0_11] : memref<24x128xf32, #tpu.memory_space<vmem>>, vector<1x128xf32>
    %c8 = arith.constant 8 : index
    %c0_12 = arith.constant 0 : index
    %6 = vector.load %arg5[%c8, %c0_12] : memref<24x128xf32, #tpu.memory_space<vmem>>, vector<8x128xf32>
    %c16 = arith.constant 16 : index
    %c0_13 = arith.constant 0 : index
    %7 = vector.load %arg5[%c16, %c0_13] : memref<24x128xf32, #tpu.memory_space<vmem>>, vector<8x128xf32>
    %8 = vector.shape_cast %0 : vector<32x128xf32> to vector<32x1x128xf32>
    %9 = vector.shape_cast %1 : vector<32x128xf32> to vector<32x1x128xf32>
    %10 = arith.mulf %0, %0 : vector<32x128xf32>
    %cst = arith.constant dense<0.000000e+00> : vector<128xf32>
    %11 = vector.multi_reduction <add>, %10, %cst [0] : vector<32x128xf32> to vector<128xf32>
    %12 = vector.shape_cast %11 : vector<128xf32> to vector<1x128xf32>
    %13 = arith.mulf %1, %1 : vector<32x128xf32>
    %cst_14 = arith.constant dense<0.000000e+00> : vector<128xf32>
    %14 = vector.multi_reduction <add>, %13, %cst_14 [0] : vector<32x128xf32> to vector<128xf32>
    %15 = vector.shape_cast %14 : vector<128xf32> to vector<1x128xf32>
    %16 = arith.mulf %0, %1 : vector<32x128xf32>
    %cst_15 = arith.constant dense<0.000000e+00> : vector<128xf32>
    %17 = vector.multi_reduction <add>, %16, %cst_15 [0] : vector<32x128xf32> to vector<128xf32>
    %18 = vector.shape_cast %17 : vector<128xf32> to vector<1x128xf32>
    %19 = arith.mulf %2, %2 : vector<32x8x128xf32>
    %cst_16 = arith.constant dense<0.000000e+00> : vector<8x128xf32>
    %20 = vector.multi_reduction <add>, %19, %cst_16 [0] : vector<32x8x128xf32> to vector<8x128xf32>
    %21 = arith.mulf %3, %3 : vector<32x8x128xf32>
    %cst_17 = arith.constant dense<0.000000e+00> : vector<8x128xf32>
    %22 = vector.multi_reduction <add>, %21, %cst_17 [0] : vector<32x8x128xf32> to vector<8x128xf32>
    %23 = vector.broadcast %8 : vector<32x1x128xf32> to vector<32x8x128xf32>
    %24 = arith.mulf %23, %2 : vector<32x8x128xf32>
    %cst_18 = arith.constant dense<0.000000e+00> : vector<8x128xf32>
    %25 = vector.multi_reduction <add>, %24, %cst_18 [0] : vector<32x8x128xf32> to vector<8x128xf32>
    %26 = vector.broadcast %9 : vector<32x1x128xf32> to vector<32x8x128xf32>
    %27 = arith.mulf %2, %26 : vector<32x8x128xf32>
    %cst_19 = arith.constant dense<0.000000e+00> : vector<8x128xf32>
    %28 = vector.multi_reduction <add>, %27, %cst_19 [0] : vector<32x8x128xf32> to vector<8x128xf32>
    %29 = vector.broadcast %8 : vector<32x1x128xf32> to vector<32x8x128xf32>
    %30 = arith.mulf %29, %3 : vector<32x8x128xf32>
    %cst_20 = arith.constant dense<0.000000e+00> : vector<8x128xf32>
    %31 = vector.multi_reduction <add>, %30, %cst_20 [0] : vector<32x8x128xf32> to vector<8x128xf32>
    %cst_21 = arith.constant 2.000000e+00 : f32
    %32 = vector.broadcast %cst_21 : f32 to vector<8x128xf32>
    %33 = arith.mulf %32, %25 : vector<8x128xf32>
    %34 = vector.broadcast %12 : vector<1x128xf32> to vector<8x128xf32>
    %35 = arith.subf %33, %34 : vector<8x128xf32>
    %36 = arith.subf %35, %20 : vector<8x128xf32>
    %cst_22 = arith.constant dense<0xFF800000> : vector<128xf32>
    %37 = vector.multi_reduction <maximumf>, %36, %cst_22 [0] : vector<8x128xf32> to vector<128xf32>
    %38 = vector.shape_cast %37 : vector<128xf32> to vector<1x128xf32>
    %39 = vector.broadcast %38 : vector<1x128xf32> to vector<8x128xf32>
    %40 = arith.subf %36, %39 : vector<8x128xf32>
    %41 = math.exp %40 : vector<8x128xf32>
    %cst_23 = arith.constant dense<0.000000e+00> : vector<128xf32>
    %42 = vector.multi_reduction <add>, %41, %cst_23 [0] : vector<8x128xf32> to vector<128xf32>
    %43 = vector.shape_cast %42 : vector<128xf32> to vector<1x128xf32>
    %44 = tpu.reciprocal %43 {approx = true} : vector<1x128xf32> -> vector<1x128xf32>
    %45 = vector.broadcast %44 : vector<1x128xf32> to vector<8x128xf32>
    %46 = arith.mulf %41, %45 : vector<8x128xf32>
    %47 = vector.broadcast %5 : vector<1x128xf32> to vector<8x128xf32>
    %48 = arith.subf %47, %6 : vector<8x128xf32>
    %49 = math.absf %48 : vector<8x128xf32>
    %50 = arith.mulf %46, %7 : vector<8x128xf32>
    %51 = vector.broadcast %4 : vector<1x128xf32> to vector<8x128xf32>
    %52 = arith.mulf %51, %49 : vector<8x128xf32>
    %53 = math.exp %52 : vector<8x128xf32>
    %54 = arith.mulf %50, %53 : vector<8x128xf32>
    %cst_24 = arith.constant 2.000000e+00 : f32
    %55 = vector.broadcast %cst_24 : f32 to vector<1x128xf32>
    %56 = arith.mulf %55, %18 : vector<1x128xf32>
    %57 = arith.subf %56, %12 : vector<1x128xf32>
    %58 = arith.subf %57, %15 : vector<1x128xf32>
    %cst_25 = arith.constant 2.000000e+00 : f32
    %59 = vector.broadcast %cst_25 : f32 to vector<8x128xf32>
    %60 = arith.mulf %59, %28 : vector<8x128xf32>
    %61 = arith.subf %60, %20 : vector<8x128xf32>
    %62 = vector.broadcast %15 : vector<1x128xf32> to vector<8x128xf32>
    %63 = arith.subf %61, %62 : vector<8x128xf32>
    %cst_26 = arith.constant 2.000000e+00 : f32
    %64 = vector.broadcast %cst_26 : f32 to vector<8x128xf32>
    %65 = arith.mulf %64, %31 : vector<8x128xf32>
    %66 = vector.broadcast %12 : vector<1x128xf32> to vector<8x128xf32>
    %67 = arith.subf %65, %66 : vector<8x128xf32>
    %68 = arith.subf %67, %22 : vector<8x128xf32>
    %69 = arith.mulf %54, %63 : vector<8x128xf32>
    %cst_27 = arith.constant dense<0.000000e+00> : vector<128xf32>
    %70 = vector.multi_reduction <add>, %69, %cst_27 [0] : vector<8x128xf32> to vector<128xf32>
    %71 = vector.shape_cast %70 : vector<128xf32> to vector<1x128xf32>
    %72 = arith.addf %58, %71 : vector<1x128xf32>
    %73 = vector.shape_cast %54 : vector<8x128xf32> to vector<1x8x128xf32>
    %74 = vector.broadcast %73 : vector<1x8x128xf32> to vector<32x8x128xf32>
    %75 = arith.mulf %74, %2 : vector<32x8x128xf32>
    %cst_28 = arith.constant dense<0.000000e+00> : vector<32x128xf32>
    %76 = vector.multi_reduction <add>, %75, %cst_28 [1] : vector<32x8x128xf32> to vector<32x128xf32>
    %77 = vector.shape_cast %76 : vector<32x128xf32> to vector<32x1x128xf32>
    %78 = vector.broadcast %77 : vector<32x1x128xf32> to vector<32x8x128xf32>
    %79 = arith.mulf %78, %3 : vector<32x8x128xf32>
    %cst_29 = arith.constant dense<0.000000e+00> : vector<8x128xf32>
    %80 = vector.multi_reduction <add>, %79, %cst_29 [0] : vector<32x8x128xf32> to vector<8x128xf32>
    %81 = arith.mulf %54, %20 : vector<8x128xf32>
    %cst_30 = arith.constant dense<0.000000e+00> : vector<128xf32>
    %82 = vector.multi_reduction <add>, %81, %cst_30 [0] : vector<8x128xf32> to vector<128xf32>
    %83 = vector.shape_cast %82 : vector<128xf32> to vector<1x128xf32>
    %cst_31 = arith.constant dense<0.000000e+00> : vector<128xf32>
    %84 = vector.multi_reduction <add>, %54, %cst_31 [0] : vector<8x128xf32> to vector<128xf32>
    %85 = vector.shape_cast %84 : vector<128xf32> to vector<1x128xf32>
    %cst_32 = arith.constant 2.000000e+00 : f32
    %86 = vector.broadcast %cst_32 : f32 to vector<8x128xf32>
    %87 = arith.mulf %86, %80 : vector<8x128xf32>
    %88 = arith.addf %68, %87 : vector<8x128xf32>
    %89 = vector.broadcast %83 : vector<1x128xf32> to vector<8x128xf32>
    %90 = arith.subf %88, %89 : vector<8x128xf32>
    %91 = vector.broadcast %85 : vector<1x128xf32> to vector<8x128xf32>
    %92 = arith.mulf %91, %22 : vector<8x128xf32>
    %93 = arith.subf %90, %92 : vector<8x128xf32>
    %94 = arith.negf %72 : vector<1x128xf32>
    %95 = math.exp %94 : vector<1x128xf32>
    %cst_33 = arith.constant 1.000000e+00 : f32
    %96 = vector.broadcast %cst_33 : f32 to vector<1x128xf32>
    %97 = arith.addf %96, %95 : vector<1x128xf32>
    %98 = arith.divf %96, %97 : vector<1x128xf32>
    %cst_34 = arith.constant 9.99999997E-7 : f32
    %99 = vector.broadcast %cst_34 : f32 to vector<1x128xf32>
    %100 = arith.addf %98, %99 : vector<1x128xf32>
    %101 = math.log %100 : vector<1x128xf32>
    %cst_35 = arith.constant 0.000000e+00 : f32
    %102 = vector.broadcast %cst_35 : f32 to vector<1x128xf32>
    %103 = arith.subf %102, %101 : vector<1x128xf32>
    %cst_36 = arith.constant 0.000000e+00 : f32
    %104 = vector.broadcast %cst_36 : f32 to vector<8x128xf32>
    %105 = arith.subf %104, %93 : vector<8x128xf32>
    %106 = arith.negf %105 : vector<8x128xf32>
    %107 = math.exp %106 : vector<8x128xf32>
    %cst_37 = arith.constant 1.000000e+00 : f32
    %108 = vector.broadcast %cst_37 : f32 to vector<8x128xf32>
    %109 = arith.addf %108, %107 : vector<8x128xf32>
    %110 = arith.divf %108, %109 : vector<8x128xf32>
    %cst_38 = arith.constant 9.99999997E-7 : f32
    %111 = vector.broadcast %cst_38 : f32 to vector<8x128xf32>
    %112 = arith.addf %110, %111 : vector<8x128xf32>
    %113 = math.log %112 : vector<8x128xf32>
    %cst_39 = arith.constant dense<0.000000e+00> : vector<128xf32>
    %114 = vector.multi_reduction <add>, %113, %cst_39 [0] : vector<8x128xf32> to vector<128xf32>
    %115 = vector.shape_cast %114 : vector<128xf32> to vector<1x128xf32>
    %116 = arith.subf %103, %115 : vector<1x128xf32>
    %c0_40 = arith.constant 0 : index
    %c0_41 = arith.constant 0 : index
    %117 = vector.load %arg6[%c0_40, %c0_41] : memref<1x128xf32, #tpu.memory_space<vmem>>, vector<1x128xf32>
    tpu.vector_store %arg6[%c0_40, %c0_41], %116 {strides = array<i32>} : memref<1x128xf32, #tpu.memory_space<vmem>>, vector<1x128xf32>,
    return
  }
  func.func @transform_0(%arg0: i32) -> (i32, i32) {
    %c0_i32 = arith.constant 0 : i32
    %c0_i32_0 = arith.constant 0 : i32
    return %c0_i32, %arg0 : i32, i32
  }
  func.func @transform_1(%arg0: i32) -> (i32, i32) {
    %c0_i32 = arith.constant 0 : i32
    %c0_i32_0 = arith.constant 0 : i32
    return %c0_i32, %arg0 : i32, i32
  }
  func.func @transform_2(%arg0: i32) -> (i32, i32, i32) {
    %c0_i32 = arith.constant 0 : i32
    %c0_i32_0 = arith.constant 0 : i32
    %c0_i32_1 = arith.constant 0 : i32
    return %c0_i32, %c0_i32_0, %arg0 : i32, i32, i32
  }
  func.func @transform_3(%arg0: i32) -> (i32, i32, i32) {
    %c0_i32 = arith.constant 0 : i32
    %c0_i32_0 = arith.constant 0 : i32
    %c0_i32_1 = arith.constant 0 : i32
    return %c0_i32, %c0_i32_0, %arg0 : i32, i32, i32
  }
  func.func @transform_4(%arg0: i32) -> (i32, i32) {
    %c0_i32 = arith.constant 0 : i32
    %c0_i32_0 = arith.constant 0 : i32
    return %c0_i32, %arg0 : i32, i32
  }
  func.func @transform_5(%arg0: i32) -> (i32, i32) {
    %c0_i32 = arith.constant 0 : i32
    %c0_i32_0 = arith.constant 0 : i32
    return %c0_i32, %arg0 : i32, i32
  }
}

</mosaic_0001>

<llo_original>
// kernel: tpu_custom_call.1
$region0: #{tpu_custom_call.1}
  #allocation0 [shape = 'u32[]', space=smem, size = 0x4, offset = 0x4, fixed_abs, tag = 'smem constant byte address 0x4 - core index']
  #allocation1 [shape = 'u32[144,128]{1,0:T(1,128)}', space=vmem, size = 0x12000, scoped, tag = 'internal scratch']
  %s0 = inlined_call_operand.hbm [shape: f32[32,128], index: 0, kind: input, shape index: {}]
  %s1 = inlined_call_operand.hbm [shape: f32[32,128], index: 1, kind: input, shape index: {}]
  %s2 = inlined_call_operand.hbm [shape: f32[32,8,128], index: 2, kind: input, shape index: {}]
  %s3 = inlined_call_operand.hbm [shape: f32[32,8,128], index: 3, kind: input, shape index: {}]
  %s4 = inlined_call_operand.hbm [shape: f32[24,128], index: 4, kind: input, shape index: {}]
  %s5 = inlined_call_operand.hbm [shape: f32[1,128], index: 5, kind: output, shape index: {}]
  %s6 = sld [smem:[#allocation0]]
  $region50: #{tpu_custom_call.1} parent=0
    _
  %s8 = ssub.s32 1, %s6
  %s9 = scalar_select 0, %s8, %s6
  $region1: #{tpu_custom_call.1} parent=0
    #allocation2 [shape = 'u8[16384]{0}', space=vmem, size = 0x4000, scoped, tag = 'input window, operand 0, single buffered']
    #allocation3 [shape = 's32[1]{0}', space=sflag, size = 0x4, scoped, tag = 'scoped memory for tpu_custom_call.1']
    #allocation4 [shape = 's32[1]{0}', space=sflag, size = 0x4, scoped, tag = 'scoped memory for tpu_custom_call.1']
    #allocation5 [shape = 'u8[16384]{0}', space=vmem, size = 0x4000, scoped, tag = 'input window, operand 1, single buffered']
    #allocation6 [shape = 's32[1]{0}', space=sflag, size = 0x4, scoped, tag = 'scoped memory for tpu_custom_call.1']
    #allocation7 [shape = 'u8[131072]{0}', space=vmem, size = 0x20000, scoped, tag = 'input window, operand 2, single buffered']
    #allocation8 [shape = 'u8[131072]{0}', space=vmem, size = 0x20000, scoped, tag = 'input window, operand 3, single buffered']
    #allocation9 [shape = 's32[1]{0}', space=sflag, size = 0x4, scoped, tag = 'scoped memory for tpu_custom_call.1']
    #allocation10 [shape = 'u8[12288]{0}', space=vmem, size = 0x3000, scoped, tag = 'input window, operand 4, single buffered']
    #allocation11 [shape = 'u8[512]{0}', space=vmem, size = 0x400, scoped, tag = 'output window, operand 0, single buffered']
    %10 = vsyncpa [#allocation3], 0
    %11 = vsyncpa [#allocation6], 0
    %12 = vsyncpa [#allocation9], 0
    %13 = vsyncpa [#allocation4], 0
    // Predicated region
    $region2: #{tpu_custom_call.1} parent=1 // pred_check
      _
    $region3: #{tpu_custom_call.1} parent=1 // pred_check_branch
      %15 = sbr.rel (0) target = $region5
    $region4: #{tpu_custom_call.1} parent=1 // pred_region
      %s17 = ssub.s32 512, 512
      %18 = vsyncadd [#allocation3], %s17
      %s19 = sshll.u32 [#allocation2], 4
      %s20 = int_to_ptr.vmem [resolvable:$true] %s19
      %25 = dma.hbm_to_vmem [thread:$0]  %s0, 512, %s20, [#allocation3], 128, 128, 8
    $region5: #{tpu_custom_call.1} parent=1 // pred_fallthru
      _
    // Predicated region
    $region6: #{tpu_custom_call.1} parent=1 // pred_check
      _
    $region7: #{tpu_custom_call.1} parent=1 // pred_check_branch
      %27 = sbr.rel (0) target = $region9
    $region8: #{tpu_custom_call.1} parent=1 // pred_region
      %s29 = ssub.s32 512, 512
      %30 = vsyncadd [#allocation6], %s29
      %s31 = sshll.u32 [#allocation5], 4
      %s32 = int_to_ptr.vmem [resolvable:$true] %s31
      %37 = dma.hbm_to_vmem [thread:$0]  %s1, 512, %s32, [#allocation6], 128, 128, 8
    $region9: #{tpu_custom_call.1} parent=1 // pred_fallthru
      _
    // Predicated region
    $region10: #{tpu_custom_call.1} parent=1 // pred_check
      _
    $region11: #{tpu_custom_call.1} parent=1 // pred_check_branch
      %39 = sbr.rel (0) target = $region13
    $region12: #{tpu_custom_call.1} parent=1 // pred_region
      %s41 = ssub.s32 4096, 4096
      %42 = vsyncadd [#allocation6], %s41
      %s43 = sshll.u32 [#allocation7], 4
      %s44 = int_to_ptr.vmem [resolvable:$true] %s43
      %49 = dma.hbm_to_vmem [thread:$0]  %s2, 4096, %s44, [#allocation6], 128, 128, 8
    $region13: #{tpu_custom_call.1} parent=1 // pred_fallthru
      _
    // Predicated region
    $region14: #{tpu_custom_call.1} parent=1 // pred_check
      _
    $region15: #{tpu_custom_call.1} parent=1 // pred_check_branch
      %51 = sbr.rel (0) target = $region17
    $region16: #{tpu_custom_call.1} parent=1 // pred_region
      %s53 = ssub.s32 4096, 4096
      %54 = vsyncadd [#allocation9], %s53
      %s55 = sshll.u32 [#allocation8], 4
      %s56 = int_to_ptr.vmem [resolvable:$true] %s55
      %61 = dma.hbm_to_vmem [thread:$0]  %s3, 4096, %s56, [#allocation9], 128, 128, 8
    $region17: #{tpu_custom_call.1} parent=1 // pred_fallthru
      _
    // Predicated region
    $region18: #{tpu_custom_call.1} parent=1 // pred_check
      _
    $region19: #{tpu_custom_call.1} parent=1 // pred_check_branch
      %63 = sbr.rel (0) target = $region21
    $region20: #{tpu_custom_call.1} parent=1 // pred_region
      %s65 = ssub.s32 384, 384
      %66 = vsyncadd [#allocation9], %s65
      %s67 = sshll.u32 [#allocation10], 4
      %s68 = int_to_ptr.vmem [resolvable:$true] %s67
      %73 = dma.hbm_to_vmem [thread:$0]  %s4, 384, %s68, [#allocation9], 128, 128, 8
    $region21: #{tpu_custom_call.1} parent=1 // pred_fallthru
      _
    // Predicated region
    $region22: #{tpu_custom_call.1} parent=1 // pred_check
      _
    $region23: #{tpu_custom_call.1} parent=1 // pred_check_branch
      %75 = sbr.rel (0) target = $region25
    $region24: #{tpu_custom_call.1} parent=1 // pred_region
      %76 = dma.done [#allocation3], 512
    $region25: #{tpu_custom_call.1} parent=1 // pred_fallthru
      _
    // Predicated region
    $region26: #{tpu_custom_call.1} parent=1 // pred_check
      _
    $region27: #{tpu_custom_call.1} parent=1 // pred_check_branch
      %78 = sbr.rel (0) target = $region29
    $region28: #{tpu_custom_call.1} parent=1 // pred_region
      %79 = dma.done [#allocation6], 512
    $region29: #{tpu_custom_call.1} parent=1 // pred_fallthru
      _
    // Predicated region
    $region30: #{tpu_custom_call.1} parent=1 // pred_check
      _
    $region31: #{tpu_custom_call.1} parent=1 // pred_check_branch
      %81 = sbr.rel (0) target = $region33
    $region32: #{tpu_custom_call.1} parent=1 // pred_region
      %82 = dma.done [#allocation6], 4096
    $region33: #{tpu_custom_call.1} parent=1 // pred_fallthru
      _
    // Predicated region
    $region34: #{tpu_custom_call.1} parent=1 // pred_check
      _
    $region35: #{tpu_custom_call.1} parent=1 // pred_check_branch
      %84 = sbr.rel (0) target = $region37
    $region36: #{tpu_custom_call.1} parent=1 // pred_region
      %85 = dma.done [#allocation9], 4096
    $region37: #{tpu_custom_call.1} parent=1 // pred_fallthru
      _
    // Predicated region
    $region38: #{tpu_custom_call.1} parent=1 // pred_check
      _
    $region39: #{tpu_custom_call.1} parent=1 // pred_check_branch
      %87 = sbr.rel (0) target = $region41
    $region40: #{tpu_custom_call.1} parent=1 // pred_region
      %88 = dma.done [#allocation9], 384
    $region41: #{tpu_custom_call.1} parent=1 // pred_fallthru
      _
    %v89 = vld [vmem:[#allocation2] sm:$0xff]
    %v90 = vld [vmem:[#allocation2 + $0x8] sm:$0xff]
    %v91 = vld [vmem:[#allocation2 + $0x10] sm:$0xff]
    %v92 = vld [vmem:[#allocation2 + $0x18] sm:$0xff]
    %v93 = vld [vmem:[#allocation5] sm:$0xff]
    %v94 = vld [vmem:[#allocation5 + $0x8] sm:$0xff]
    %v95 = vld [vmem:[#allocation5 + $0x10] sm:$0xff]
    %v96 = vld [vmem:[#allocation5 + $0x18] sm:$0xff]
    %v97 = vld [vmem:[#allocation7] sm:$0xff]
    %v98 = vld [vmem:[#allocation7 + $0x8] sm:$0xff]
    %v99 = vld [vmem:[#allocation7 + $0x10] sm:$0xff]
    %v100 = vld [vmem:[#allocation7 + $0x18] sm:$0xff]
    %v101 = vld [vmem:[#allocation7 + $0x20] sm:$0xff]
    %v102 = vld [vmem:[#allocation7 + $0x28] sm:$0xff]
    %v103 = vld [vmem:[#allocation7 + $0x30] sm:$0xff]
    %v104 = vld [vmem:[#allocation7 + $0x38] sm:$0xff]
    %v105 = vld [vmem:[#allocation7 + $0x40] sm:$0xff]
    %v106 = vld [vmem:[#allocation7 + $0x48] sm:$0xff]
    %v107 = vld [vmem:[#allocation7 + $0x50] sm:$0xff]
    %v108 = vld [vmem:[#allocation7 + $0x58] sm:$0xff]
    %v109 = vld [vmem:[#allocation7 + $0x60] sm:$0xff]
    %v110 = vld [vmem:[#allocation7 + $0x68] sm:$0xff]
    %v111 = vld [vmem:[#allocation7 + $0x70] sm:$0xff]
    %v112 = vld [vmem:[#allocation7 + $0x78] sm:$0xff]
    %v113 = vld [vmem:[#allocation7 + $0x80] sm:$0xff]
    %v114 = vld [vmem:[#allocation7 + $0x88] sm:$0xff]
    %v115 = vld [vmem:[#allocation7 + $0x90] sm:$0xff]
    %v116 = vld [vmem:[#allocation7 + $0x98] sm:$0xff]
    %v117 = vld [vmem:[#allocation7 + $0xa0] sm:$0xff]
    %v118 = vld [vmem:[#allocation7 + $0xa8] sm:$0xff]
    %v119 = vld [vmem:[#allocation7 + $0xb0] sm:$0xff]
    %v120 = vld [vmem:[#allocation7 + $0xb8] sm:$0xff]
    %v121 = vld [vmem:[#allocation7 + $0xc0] sm:$0xff]
    %v122 = vld [vmem:[#allocation7 + $0xc8] sm:$0xff]
    %v123 = vld [vmem:[#allocation7 + $0xd0] sm:$0xff]
    %v124 = vld [vmem:[#allocation7 + $0xd8] sm:$0xff]
    %v125 = vld [vmem:[#allocation7 + $0xe0] sm:$0xff]
    %v126 = vld [vmem:[#allocation7 + $0xe8] sm:$0xff]
    %v127 = vld [vmem:[#allocation7 + $0xf0] sm:$0xff]
    %v128 = vld [vmem:[#allocation7 + $0xf8] sm:$0xff]
    %v129 = vld [vmem:[#allocation8] sm:$0xff]
    %v130 = vld [vmem:[#allocation8 + $0x8] sm:$0xff]
    %v131 = vld [vmem:[#allocation8 + $0x10] sm:$0xff]
    %v132 = vld [vmem:[#allocation8 + $0x18] sm:$0xff]
    %v133 = vld [vmem:[#allocation8 + $0x20] sm:$0xff]
    %v134 = vld [vmem:[#allocation8 + $0x28] sm:$0xff]
    %v135 = vld [vmem:[#allocation8 + $0x30] sm:$0xff]
    %v136 = vld [vmem:[#allocation8 + $0x38] sm:$0xff]
    %v137 = vld [vmem:[#allocation8 + $0x40] sm:$0xff]
    %v138 = vld [vmem:[#allocation8 + $0x48] sm:$0xff]
    %v139 = vld [vmem:[#allocation8 + $0x50] sm:$0xff]
    %v140 = vld [vmem:[#allocation8 + $0x58] sm:$0xff]
    %v141 = vld [vmem:[#allocation8 + $0x60] sm:$0xff]
    %v142 = vld [vmem:[#allocation8 + $0x68] sm:$0xff]
    %v143 = vld [vmem:[#allocation8 + $0x70] sm:$0xff]
    %v144 = vld [vmem:[#allocation8 + $0x78] sm:$0xff]
    %v145 = vld [vmem:[#allocation8 + $0x80] sm:$0xff]
    %v146 = vld [vmem:[#allocation8 + $0x88] sm:$0xff]
    %v147 = vld [vmem:[#allocation8 + $0x90] sm:$0xff]
    %v148 = vld [vmem:[#allocation8 + $0x98] sm:$0xff]
    %v149 = vld [vmem:[#allocation8 + $0xa0] sm:$0xff]
    %v150 = vld [vmem:[#allocation8 + $0xa8] sm:$0xff]
    %v151 = vld [vmem:[#allocation8 + $0xb0] sm:$0xff]
    %v152 = vld [vmem:[#allocation8 + $0xb8] sm:$0xff]
    %v153 = vld [vmem:[#allocation8 + $0xc0] sm:$0xff]
    %v154 = vld [vmem:[#allocation8 + $0xc8] sm:$0xff]
    %v155 = vld [vmem:[#allocation8 + $0xd0] sm:$0xff]
    %v156 = vld [vmem:[#allocation8 + $0xd8] sm:$0xff]
    %v157 = vld [vmem:[#allocation8 + $0xe0] sm:$0xff]
    %v158 = vld [vmem:[#allocation8 + $0xe8] sm:$0xff]
    %v159 = vld [vmem:[#allocation8 + $0xf0] sm:$0xff]
    %v160 = vld [vmem:[#allocation8 + $0xf8] sm:$0xff]
    %v161 = vld [vmem:[#allocation10] sm:$0x1]
    %v162 = vld [vmem:[#allocation10 + $0x1] sm:$0x1]
    %v163 = vld [vmem:[#allocation10 + $0x8] sm:$0xff]
    %v164 = vld [vmem:[#allocation10 + $0x10] sm:$0xff]
    %v169 = vcombine.high %v89, %v89
    %v171 = vunpack.c.l.s4 1966171168
    %v172 = vunpack.c.0.s8 %v171
    %v173 = vlaneseq
    %v174 = vshrl.u32 %v173, 7
    %v175 = vsub.s32 %v172, %v174
    %v176 = vrot.slane %v89, %v175
    %v178 = vunpack.c.l.s4 1966171168
    %v179 = vunpack.c.0.s8 %v178
    %v180 = vlaneseq
    %v181 = vshrl.u32 %v180, 7
    %v182 = vsub.s32 %v179, %v181
    %v183 = vrot.slane %v169, %v182
    %v184 = vcombine.high %v176, %v176
    %v185 = vcombine.high %v183, %v183
    %v187 = vunpack.c.l.s4 1966171168
    %v188 = vunpack.c.0.s8 %v187
    %v189 = vlaneseq
    %v190 = vshrl.u32 %v189, 7
    %v191 = vsub.s32 %v188, %v190
    %v192 = vrot.slane %v176, %v191
    %v194 = vunpack.c.l.s4 1966171168
    %v195 = vunpack.c.0.s8 %v194
    %v196 = vlaneseq
    %v197 = vshrl.u32 %v196, 7
    %v198 = vsub.s32 %v195, %v197
    %v199 = vrot.slane %v183, %v198
    %v201 = vunpack.c.l.s4 1966171168
    %v202 = vunpack.c.0.s8 %v201
    %v203 = vlaneseq
    %v204 = vshrl.u32 %v203, 7
    %v205 = vsub.s32 %v202, %v204
    %v206 = vrot.slane %v184, %v205
    %v208 = vunpack.c.l.s4 1966171168
    %v209 = vunpack.c.0.s8 %v208
    %v210 = vlaneseq
    %v211 = vshrl.u32 %v210, 7
    %v212 = vsub.s32 %v209, %v211
    %v213 = vrot.slane %v185, %v212
    %v214 = vcombine.high %v192, %v192
    %v215 = vcombine.high %v199, %v199
    %v216 = vcombine.high %v206, %v206
    %v217 = vcombine.high %v213, %v213
    %v218 = vcombine.high %v90, %v90
    %v220 = vunpack.c.l.s4 1966171168
    %v221 = vunpack.c.0.s8 %v220
    %v222 = vlaneseq
    %v223 = vshrl.u32 %v222, 7
    %v224 = vsub.s32 %v221, %v223
    %v225 = vrot.slane %v90, %v224
    %v227 = vunpack.c.l.s4 1966171168
    %v228 = vunpack.c.0.s8 %v227
    %v229 = vlaneseq
    %v230 = vshrl.u32 %v229, 7
    %v231 = vsub.s32 %v228, %v230
    %v232 = vrot.slane %v218, %v231
    %v233 = vcombine.high %v225, %v225
    %v234 = vcombine.high %v232, %v232
    %v236 = vunpack.c.l.s4 1966171168
    %v237 = vunpack.c.0.s8 %v236
    %v238 = vlaneseq
    %v239 = vshrl.u32 %v238, 7
    %v240 = vsub.s32 %v237, %v239
    %v241 = vrot.slane %v225, %v240
    %v243 = vunpack.c.l.s4 1966171168
    %v244 = vunpack.c.0.s8 %v243
    %v245 = vlaneseq
    %v246 = vshrl.u32 %v245, 7
    %v247 = vsub.s32 %v244, %v246
    %v248 = vrot.slane %v232, %v247
    %v250 = vunpack.c.l.s4 1966171168
    %v251 = vunpack.c.0.s8 %v250
    %v252 = vlaneseq
    %v253 = vshrl.u32 %v252, 7
    %v254 = vsub.s32 %v251, %v253
    %v255 = vrot.slane %v233, %v254
    %v257 = vunpack.c.l.s4 1966171168
    %v258 = vunpack.c.0.s8 %v257
    %v259 = vlaneseq
    %v260 = vshrl.u32 %v259, 7
    %v261 = vsub.s32 %v258, %v260
    %v262 = vrot.slane %v234, %v261
    %v263 = vcombine.high %v241, %v241
    %v264 = vcombine.high %v248, %v248
    %v265 = vcombine.high %v255, %v255
    %v266 = vcombine.high %v262, %v262
    %v267 = vcombine.high %v91, %v91
    %v269 = vunpack.c.l.s4 1966171168
    %v270 = vunpack.c.0.s8 %v269
    %v271 = vlaneseq
    %v272 = vshrl.u32 %v271, 7
    %v273 = vsub.s32 %v270, %v272
    %v274 = vrot.slane %v91, %v273
    %v276 = vunpack.c.l.s4 1966171168
    %v277 = vunpack.c.0.s8 %v276
    %v278 = vlaneseq
    %v279 = vshrl.u32 %v278, 7
    %v280 = vsub.s32 %v277, %v279
    %v281 = vrot.slane %v267, %v280
    %v282 = vcombine.high %v274, %v274
    %v283 = vcombine.high %v281, %v281
    %v285 = vunpack.c.l.s4 1966171168
    %v286 = vunpack.c.0.s8 %v285
    %v287 = vlaneseq
    %v288 = vshrl.u32 %v287, 7
    %v289 = vsub.s32 %v286, %v288
    %v290 = vrot.slane %v274, %v289
    %v292 = vunpack.c.l.s4 1966171168
    %v293 = vunpack.c.0.s8 %v292
    %v294 = vlaneseq
    %v295 = vshrl.u32 %v294, 7
    %v296 = vsub.s32 %v293, %v295
    %v297 = vrot.slane %v281, %v296
    %v299 = vunpack.c.l.s4 1966171168
    %v300 = vunpack.c.0.s8 %v299
    %v301 = vlaneseq
    %v302 = vshrl.u32 %v301, 7
    %v303 = vsub.s32 %v300, %v302
    %v304 = vrot.slane %v282, %v303
    %v306 = vunpack.c.l.s4 1966171168
    %v307 = vunpack.c.0.s8 %v306
    %v308 = vlaneseq
    %v309 = vshrl.u32 %v308, 7
    %v310 = vsub.s32 %v307, %v309
    %v311 = vrot.slane %v283, %v310
    %v312 = vcombine.high %v290, %v290
    %v313 = vcombine.high %v297, %v297
    %v314 = vcombine.high %v304, %v304
    %v315 = vcombine.high %v311, %v311
    %v316 = vcombine.high %v92, %v92
    %v318 = vunpack.c.l.s4 1966171168
    %v319 = vunpack.c.0.s8 %v318
    %v320 = vlaneseq
    %v321 = vshrl.u32 %v320, 7
    %v322 = vsub.s32 %v319, %v321
    %v323 = vrot.slane %v92, %v322
    %v325 = vunpack.c.l.s4 1966171168
    %v326 = vunpack.c.0.s8 %v325
    %v327 = vlaneseq
    %v328 = vshrl.u32 %v327, 7
    %v329 = vsub.s32 %v326, %v328
    %v330 = vrot.slane %v316, %v329
    %v331 = vcombine.high %v323, %v323
    %v332 = vcombine.high %v330, %v330
    %v334 = vunpack.c.l.s4 1966171168
    %v335 = vunpack.c.0.s8 %v334
    %v336 = vlaneseq
    %v337 = vshrl.u32 %v336, 7
    %v338 = vsub.s32 %v335, %v337
    %v339 = vrot.slane %v323, %v338
    %v341 = vunpack.c.l.s4 1966171168
    %v342 = vunpack.c.0.s8 %v341
    %v343 = vlaneseq
    %v344 = vshrl.u32 %v343, 7
    %v345 = vsub.s32 %v342, %v344
    %v346 = vrot.slane %v330, %v345
    %v348 = vunpack.c.l.s4 1966171168
    %v349 = vunpack.c.0.s8 %v348
    %v350 = vlaneseq
    %v351 = vshrl.u32 %v350, 7
    %v352 = vsub.s32 %v349, %v351
    %v353 = vrot.slane %v331, %v352
    %v355 = vunpack.c.l.s4 1966171168
    %v356 = vunpack.c.0.s8 %v355
    %v357 = vlaneseq
    %v358 = vshrl.u32 %v357, 7
    %v359 = vsub.s32 %v356, %v358
    %v360 = vrot.slane %v332, %v359
    %v361 = vcombine.high %v339, %v339
    %v362 = vcombine.high %v346, %v346
    %v363 = vcombine.high %v353, %v353
    %v364 = vcombine.high %v360, %v360
    %v369 = vcombine.high %v93, %v93
    %v371 = vunpack.c.l.s4 1966171168
    %v372 = vunpack.c.0.s8 %v371
    %v373 = vlaneseq
    %v374 = vshrl.u32 %v373, 7
    %v375 = vsub.s32 %v372, %v374
    %v376 = vrot.slane %v93, %v375
    %v378 = vunpack.c.l.s4 1966171168
    %v379 = vunpack.c.0.s8 %v378
    %v380 = vlaneseq
    %v381 = vshrl.u32 %v380, 7
    %v382 = vsub.s32 %v379, %v381
    %v383 = vrot.slane %v369, %v382
    %v384 = vcombine.high %v376, %v376
    %v385 = vcombine.high %v383, %v383
    %v387 = vunpack.c.l.s4 1966171168
    %v388 = vunpack.c.0.s8 %v387
    %v389 = vlaneseq
    %v390 = vshrl.u32 %v389, 7
    %v391 = vsub.s32 %v388, %v390
    %v392 = vrot.slane %v376, %v391
    %v394 = vunpack.c.l.s4 1966171168
    %v395 = vunpack.c.0.s8 %v394
    %v396 = vlaneseq
    %v397 = vshrl.u32 %v396, 7
    %v398 = vsub.s32 %v395, %v397
    %v399 = vrot.slane %v383, %v398
    %v401 = vunpack.c.l.s4 1966171168
    %v402 = vunpack.c.0.s8 %v401
    %v403 = vlaneseq
    %v404 = vshrl.u32 %v403, 7
    %v405 = vsub.s32 %v402, %v404
    %v406 = vrot.slane %v384, %v405
    %v408 = vunpack.c.l.s4 1966171168
    %v409 = vunpack.c.0.s8 %v408
    %v410 = vlaneseq
    %v411 = vshrl.u32 %v410, 7
    %v412 = vsub.s32 %v409, %v411
    %v413 = vrot.slane %v385, %v412
    %v414 = vcombine.high %v392, %v392
    %v415 = vcombine.high %v399, %v399
    %v416 = vcombine.high %v406, %v406
    %v417 = vcombine.high %v413, %v413
    %v418 = vcombine.high %v94, %v94
    %v420 = vunpack.c.l.s4 1966171168
    %v421 = vunpack.c.0.s8 %v420
    %v422 = vlaneseq
    %v423 = vshrl.u32 %v422, 7
    %v424 = vsub.s32 %v421, %v423
    %v425 = vrot.slane %v94, %v424
    %v427 = vunpack.c.l.s4 1966171168
    %v428 = vunpack.c.0.s8 %v427
    %v429 = vlaneseq
    %v430 = vshrl.u32 %v429, 7
    %v431 = vsub.s32 %v428, %v430
    %v432 = vrot.slane %v418, %v431
    %v433 = vcombine.high %v425, %v425
    %v434 = vcombine.high %v432, %v432
    %v436 = vunpack.c.l.s4 1966171168
    %v437 = vunpack.c.0.s8 %v436
    %v438 = vlaneseq
    %v439 = vshrl.u32 %v438, 7
    %v440 = vsub.s32 %v437, %v439
    %v441 = vrot.slane %v425, %v440
    %v443 = vunpack.c.l.s4 1966171168
    %v444 = vunpack.c.0.s8 %v443
    %v445 = vlaneseq
    %v446 = vshrl.u32 %v445, 7
    %v447 = vsub.s32 %v444, %v446
    %v448 = vrot.slane %v432, %v447
    %v450 = vunpack.c.l.s4 1966171168
    %v451 = vunpack.c.0.s8 %v450
    %v452 = vlaneseq
    %v453 = vshrl.u32 %v452, 7
    %v454 = vsub.s32 %v451, %v453
    %v455 = vrot.slane %v433, %v454
    %v457 = vunpack.c.l.s4 1966171168
    %v458 = vunpack.c.0.s8 %v457
    %v459 = vlaneseq
    %v460 = vshrl.u32 %v459, 7
    %v461 = vsub.s32 %v458, %v460
    %v462 = vrot.slane %v434, %v461
    %v463 = vcombine.high %v441, %v441
    %v464 = vcombine.high %v448, %v448
    %v465 = vcombine.high %v455, %v455
    %v466 = vcombine.high %v462, %v462
    %v467 = vcombine.high %v95, %v95
    %v469 = vunpack.c.l.s4 1966171168
    %v470 = vunpack.c.0.s8 %v469
    %v471 = vlaneseq
    %v472 = vshrl.u32 %v471, 7
    %v473 = vsub.s32 %v470, %v472
    %v474 = vrot.slane %v95, %v473
    %v476 = vunpack.c.l.s4 1966171168
    %v477 = vunpack.c.0.s8 %v476
    %v478 = vlaneseq
    %v479 = vshrl.u32 %v478, 7
    %v480 = vsub.s32 %v477, %v479
    %v481 = vrot.slane %v467, %v480
    %v482 = vcombine.high %v474, %v474
    %v483 = vcombine.high %v481, %v481
    %v485 = vunpack.c.l.s4 1966171168
    %v486 = vunpack.c.0.s8 %v485
    %v487 = vlaneseq
    %v488 = vshrl.u32 %v487, 7
    %v489 = vsub.s32 %v486, %v488
    %v490 = vrot.slane %v474, %v489
    %v492 = vunpack.c.l.s4 1966171168
    %v493 = vunpack.c.0.s8 %v492
    %v494 = vlaneseq
    %v495 = vshrl.u32 %v494, 7
    %v496 = vsub.s32 %v493, %v495
    %v497 = vrot.slane %v481, %v496
    %v499 = vunpack.c.l.s4 1966171168
    %v500 = vunpack.c.0.s8 %v499
    %v501 = vlaneseq
    %v502 = vshrl.u32 %v501, 7
    %v503 = vsub.s32 %v500, %v502
    %v504 = vrot.slane %v482, %v503
    %v506 = vunpack.c.l.s4 1966171168
    %v507 = vunpack.c.0.s8 %v506
    %v508 = vlaneseq
    %v509 = vshrl.u32 %v508, 7
    %v510 = vsub.s32 %v507, %v509
    %v511 = vrot.slane %v483, %v510
    %v512 = vcombine.high %v490, %v490
    %v513 = vcombine.high %v497, %v497
    %v514 = vcombine.high %v504, %v504
    %v515 = vcombine.high %v511, %v511
    %v516 = vcombine.high %v96, %v96
    %v518 = vunpack.c.l.s4 1966171168
    %v519 = vunpack.c.0.s8 %v518
    %v520 = vlaneseq
    %v521 = vshrl.u32 %v520, 7
    %v522 = vsub.s32 %v519, %v521
    %v523 = vrot.slane %v96, %v522
    %v525 = vunpack.c.l.s4 1966171168
    %v526 = vunpack.c.0.s8 %v525
    %v527 = vlaneseq
    %v528 = vshrl.u32 %v527, 7
    %v529 = vsub.s32 %v526, %v528
    %v530 = vrot.slane %v516, %v529
    %v531 = vcombine.high %v523, %v523
    %v532 = vcombine.high %v530, %v530
    %v534 = vunpack.c.l.s4 1966171168
    %v535 = vunpack.c.0.s8 %v534
    %v536 = vlaneseq
    %v537 = vshrl.u32 %v536, 7
    %v538 = vsub.s32 %v535, %v537
    %v539 = vrot.slane %v523, %v538
    %v541 = vunpack.c.l.s4 1966171168
    %v542 = vunpack.c.0.s8 %v541
    %v543 = vlaneseq
    %v544 = vshrl.u32 %v543, 7
    %v545 = vsub.s32 %v542, %v544
    %v546 = vrot.slane %v530, %v545
    %v548 = vunpack.c.l.s4 1966171168
    %v549 = vunpack.c.0.s8 %v548
    %v550 = vlaneseq
    %v551 = vshrl.u32 %v550, 7
    %v552 = vsub.s32 %v549, %v551
    %v553 = vrot.slane %v531, %v552
    %v555 = vunpack.c.l.s4 1966171168
    %v556 = vunpack.c.0.s8 %v555
    %v557 = vlaneseq
    %v558 = vshrl.u32 %v557, 7
    %v559 = vsub.s32 %v556, %v558
    %v560 = vrot.slane %v532, %v559
    %v561 = vcombine.high %v539, %v539
    %v562 = vcombine.high %v546, %v546
    %v563 = vcombine.high %v553, %v553
    %v564 = vcombine.high %v560, %v560
    %v565 = vmul.f32 %v89, %v89
    %v566 = vmul.f32 %v90, %v90
    %v567 = vmul.f32 %v91, %v91
    %v568 = vmul.f32 %v92, %v92
    %v569 = vadd.f32 %v565, %v566
    %v570 = vadd.f32 %v569, %v567
    %v571 = vadd.f32 %v570, %v568
    %v572 = vrot.slane %v571, 4
    %v573 = vadd.f32 %v571, %v572
    %v574 = vrot.slane %v573, 2
    %v575 = vadd.f32 %v573, %v574
    %v576 = vrot.slane %v575, 1
    %v577 = vadd.f32 %v575, %v576
    %v578 = vmul.f32 %v93, %v93
    %v579 = vmul.f32 %v94, %v94
    %v580 = vmul.f32 %v95, %v95
    %v581 = vmul.f32 %v96, %v96
    %v582 = vadd.f32 %v578, %v579
    %v583 = vadd.f32 %v582, %v580
    %v584 = vadd.f32 %v583, %v581
    %v585 = vrot.slane %v584, 4
    %v586 = vadd.f32 %v584, %v585
    %v587 = vrot.slane %v586, 2
    %v588 = vadd.f32 %v586, %v587
    %v589 = vrot.slane %v588, 1
    %v590 = vadd.f32 %v588, %v589
    %v591 = vmul.f32 %v89, %v93
    %v592 = vmul.f32 %v90, %v94
    %v593 = vmul.f32 %v91, %v95
    %v594 = vmul.f32 %v92, %v96
    %v595 = vadd.f32 %v591, %v592
    %v596 = vadd.f32 %v595, %v593
    %v597 = vadd.f32 %v596, %v594
    %v598 = vrot.slane %v597, 4
    %v599 = vadd.f32 %v597, %v598
    %v600 = vrot.slane %v599, 2
    %v601 = vadd.f32 %v599, %v600
    %v602 = vrot.slane %v601, 1
    %v603 = vadd.f32 %v601, %v602
    %v604 = vmul.f32 %v97, %v97
    %v605 = vmul.f32 %v98, %v98
    %v606 = vmul.f32 %v99, %v99
    %v607 = vmul.f32 %v100, %v100
    %v608 = vmul.f32 %v101, %v101
    %v609 = vmul.f32 %v102, %v102
    %v610 = vmul.f32 %v103, %v103
    %v611 = vmul.f32 %v104, %v104
    %v612 = vmul.f32 %v105, %v105
    %v613 = vmul.f32 %v106, %v106
    %v614 = vmul.f32 %v107, %v107
    %v615 = vmul.f32 %v108, %v108
    %v616 = vmul.f32 %v109, %v109
    %v617 = vmul.f32 %v110, %v110
    %v618 = vmul.f32 %v111, %v111
    %v619 = vmul.f32 %v112, %v112
    %v620 = vmul.f32 %v113, %v113
    %v621 = vmul.f32 %v114, %v114
    %v622 = vmul.f32 %v115, %v115
    %v623 = vmul.f32 %v116, %v116
    %v624 = vmul.f32 %v117, %v117
    %v625 = vmul.f32 %v118, %v118
    %v626 = vmul.f32 %v119, %v119
    %v627 = vmul.f32 %v120, %v120
    %v628 = vmul.f32 %v121, %v121
    %v629 = vmul.f32 %v122, %v122
    %v630 = vmul.f32 %v123, %v123
    %v631 = vmul.f32 %v124, %v124
    %v632 = vmul.f32 %v125, %v125
    %v633 = vmul.f32 %v126, %v126
    %v634 = vmul.f32 %v127, %v127
    %v635 = vmul.f32 %v128, %v128
    %v636 = vadd.f32 %v604, %v605
    %v637 = vadd.f32 %v636, %v606
    %v638 = vadd.f32 %v637, %v607
    %v639 = vadd.f32 %v638, %v608
    %v640 = vadd.f32 %v639, %v609
    %v641 = vadd.f32 %v640, %v610
    %v642 = vadd.f32 %v641, %v611
    %v643 = vadd.f32 %v642, %v612
    %v644 = vadd.f32 %v643, %v613
    %v645 = vadd.f32 %v644, %v614
    %v646 = vadd.f32 %v645, %v615
    %v647 = vadd.f32 %v646, %v616
    %v648 = vadd.f32 %v647, %v617
    %v649 = vadd.f32 %v648, %v618
    %v650 = vadd.f32 %v649, %v619
    %v651 = vadd.f32 %v650, %v620
    %v652 = vadd.f32 %v651, %v621
    %v653 = vadd.f32 %v652, %v622
    %v654 = vadd.f32 %v653, %v623
    %v655 = vadd.f32 %v654, %v624
    %v656 = vadd.f32 %v655, %v625
    %v657 = vadd.f32 %v656, %v626
    %v658 = vadd.f32 %v657, %v627
    %v659 = vadd.f32 %v658, %v628
    %v660 = vadd.f32 %v659, %v629
    %v661 = vadd.f32 %v660, %v630
    %v662 = vadd.f32 %v661, %v631
    %v663 = vadd.f32 %v662, %v632
    %v664 = vadd.f32 %v663, %v633
    %v665 = vadd.f32 %v664, %v634
    %v666 = vadd.f32 %v665, %v635
    %v667 = vmul.f32 %v129, %v129
    %v668 = vmul.f32 %v130, %v130
    %v669 = vmul.f32 %v131, %v131
    %v670 = vmul.f32 %v132, %v132
    %v671 = vmul.f32 %v133, %v133
    %v672 = vmul.f32 %v134, %v134
    %v673 = vmul.f32 %v135, %v135
    %v674 = vmul.f32 %v136, %v136
    %v675 = vmul.f32 %v137, %v137
    %v676 = vmul.f32 %v138, %v138
    %v677 = vmul.f32 %v139, %v139
    %v678 = vmul.f32 %v140, %v140
    %v679 = vmul.f32 %v141, %v141
    %v680 = vmul.f32 %v142, %v142
    %v681 = vmul.f32 %v143, %v143
    %v682 = vmul.f32 %v144, %v144
    %v683 = vmul.f32 %v145, %v145
    %v684 = vmul.f32 %v146, %v146
    %v685 = vmul.f32 %v147, %v147
    %v686 = vmul.f32 %v148, %v148
    %v687 = vmul.f32 %v149, %v149
    %v688 = vmul.f32 %v150, %v150
    %v689 = vmul.f32 %v151, %v151
    %v690 = vmul.f32 %v152, %v152
    %v691 = vmul.f32 %v153, %v153
    %v692 = vmul.f32 %v154, %v154
    %v693 = vmul.f32 %v155, %v155
    %v694 = vmul.f32 %v156, %v156
    %v695 = vmul.f32 %v157, %v157
    %v696 = vmul.f32 %v158, %v158
    %v697 = vmul.f32 %v159, %v159
    %v698 = vmul.f32 %v160, %v160
    %v699 = vadd.f32 %v667, %v668
    %v700 = vadd.f32 %v699, %v669
    %v701 = vadd.f32 %v700, %v670
    %v702 = vadd.f32 %v701, %v671
    %v703 = vadd.f32 %v702, %v672
    %v704 = vadd.f32 %v703, %v673
    %v705 = vadd.f32 %v704, %v674
    %v706 = vadd.f32 %v705, %v675
    %v707 = vadd.f32 %v706, %v676
    %v708 = vadd.f32 %v707, %v677
    %v709 = vadd.f32 %v708, %v678
    %v710 = vadd.f32 %v709, %v679
    %v711 = vadd.f32 %v710, %v680
    %v712 = vadd.f32 %v711, %v681
    %v713 = vadd.f32 %v712, %v682
    %v714 = vadd.f32 %v713, %v683
    %v715 = vadd.f32 %v714, %v684
    %v716 = vadd.f32 %v715, %v685
    %v717 = vadd.f32 %v716, %v686
    %v718 = vadd.f32 %v717, %v687
    %v719 = vadd.f32 %v718, %v688
    %v720 = vadd.f32 %v719, %v689
    %v721 = vadd.f32 %v720, %v690
    %v722 = vadd.f32 %v721, %v691
    %v723 = vadd.f32 %v722, %v692
    %v724 = vadd.f32 %v723, %v693
    %v725 = vadd.f32 %v724, %v694
    %v726 = vadd.f32 %v725, %v695
    %v727 = vadd.f32 %v726, %v696
    %v728 = vadd.f32 %v727, %v697
    %v729 = vadd.f32 %v728, %v698
    %v730 = vlaneseq
    %v731 = vshrl.u32 %v730, 7
    %v732 = vsub.s32 0, %v731
    %v733 = vrot.slane %v192, %v732
    %v734 = vlaneseq
    %v735 = vshrl.u32 %v734, 7
    %v736 = vsub.s32 0, %v735
    %v737 = vrot.slane %v206, %v736
    %v738 = vlaneseq
    %v739 = vshrl.u32 %v738, 7
    %v740 = vsub.s32 0, %v739
    %v741 = vrot.slane %v214, %v740
    %v742 = vlaneseq
    %v743 = vshrl.u32 %v742, 7
    %v744 = vsub.s32 0, %v743
    %v745 = vrot.slane %v216, %v744
    %v746 = vlaneseq
    %v747 = vshrl.u32 %v746, 7
    %v748 = vsub.s32 0, %v747
    %v749 = vrot.slane %v199, %v748
    %v750 = vlaneseq
    %v751 = vshrl.u32 %v750, 7
    %v752 = vsub.s32 0, %v751
    %v753 = vrot.slane %v213, %v752
    %v754 = vlaneseq
    %v755 = vshrl.u32 %v754, 7
    %v756 = vsub.s32 0, %v755
    %v757 = vrot.slane %v215, %v756
    %v758 = vlaneseq
    %v759 = vshrl.u32 %v758, 7
    %v760 = vsub.s32 0, %v759
    %v761 = vrot.slane %v217, %v760
    %v762 = vlaneseq
    %v763 = vshrl.u32 %v762, 7
    %v764 = vsub.s32 0, %v763
    %v765 = vrot.slane %v241, %v764
    %v766 = vlaneseq
    %v767 = vshrl.u32 %v766, 7
    %v768 = vsub.s32 0, %v767
    %v769 = vrot.slane %v255, %v768
    %v770 = vlaneseq
    %v771 = vshrl.u32 %v770, 7
    %v772 = vsub.s32 0, %v771
    %v773 = vrot.slane %v263, %v772
    %v774 = vlaneseq
    %v775 = vshrl.u32 %v774, 7
    %v776 = vsub.s32 0, %v775
    %v777 = vrot.slane %v265, %v776
    %v778 = vlaneseq
    %v779 = vshrl.u32 %v778, 7
    %v780 = vsub.s32 0, %v779
    %v781 = vrot.slane %v248, %v780
    %v782 = vlaneseq
    %v783 = vshrl.u32 %v782, 7
    %v784 = vsub.s32 0, %v783
    %v785 = vrot.slane %v262, %v784
    %v786 = vlaneseq
    %v787 = vshrl.u32 %v786, 7
    %v788 = vsub.s32 0, %v787
    %v789 = vrot.slane %v264, %v788
    %v790 = vlaneseq
    %v791 = vshrl.u32 %v790, 7
    %v792 = vsub.s32 0, %v791
    %v793 = vrot.slane %v266, %v792
    %v794 = vlaneseq
    %v795 = vshrl.u32 %v794, 7
    %v796 = vsub.s32 0, %v795
    %v797 = vrot.slane %v290, %v796
    %v798 = vlaneseq
    %v799 = vshrl.u32 %v798, 7
    %v800 = vsub.s32 0, %v799
    %v801 = vrot.slane %v304, %v800
    %v802 = vlaneseq
    %v803 = vshrl.u32 %v802, 7
    %v804 = vsub.s32 0, %v803
    %v805 = vrot.slane %v312, %v804
    %v806 = vlaneseq
    %v807 = vshrl.u32 %v806, 7
    %v808 = vsub.s32 0, %v807
    %v809 = vrot.slane %v314, %v808
    %v810 = vlaneseq
    %v811 = vshrl.u32 %v810, 7
    %v812 = vsub.s32 0, %v811
    %v813 = vrot.slane %v297, %v812
    %v814 = vlaneseq
    %v815 = vshrl.u32 %v814, 7
    %v816 = vsub.s32 0, %v815
    %v817 = vrot.slane %v311, %v816
    %v818 = vlaneseq
    %v819 = vshrl.u32 %v818, 7
    %v820 = vsub.s32 0, %v819
    %v821 = vrot.slane %v313, %v820
    %v822 = vlaneseq
    %v823 = vshrl.u32 %v822, 7
    %v824 = vsub.s32 0, %v823
    %v825 = vrot.slane %v315, %v824
    %v826 = vlaneseq
    %v827 = vshrl.u32 %v826, 7
    %v828 = vsub.s32 0, %v827
    %v829 = vrot.slane %v339, %v828
    %v830 = vlaneseq
    %v831 = vshrl.u32 %v830, 7
    %v832 = vsub.s32 0, %v831
    %v833 = vrot.slane %v353, %v832
    %v834 = vlaneseq
    %v835 = vshrl.u32 %v834, 7
    %v836 = vsub.s32 0, %v835
    %v837 = vrot.slane %v361, %v836
    %v838 = vlaneseq
    %v839 = vshrl.u32 %v838, 7
    %v840 = vsub.s32 0, %v839
    %v841 = vrot.slane %v363, %v840
    %v842 = vlaneseq
    %v843 = vshrl.u32 %v842, 7
    %v844 = vsub.s32 0, %v843
    %v845 = vrot.slane %v346, %v844
    %v846 = vlaneseq
    %v847 = vshrl.u32 %v846, 7
    %v848 = vsub.s32 0, %v847
    %v849 = vrot.slane %v360, %v848
    %v850 = vlaneseq
    %v851 = vshrl.u32 %v850, 7
    %v852 = vsub.s32 0, %v851
    %v853 = vrot.slane %v362, %v852
    %v854 = vlaneseq
    %v855 = vshrl.u32 %v854, 7
    %v856 = vsub.s32 0, %v855
    %v857 = vrot.slane %v364, %v856
    %v890 = vmul.f32 %v733, %v97
    %v891 = vmul.f32 %v737, %v98
    %v892 = vmul.f32 %v741, %v99
    %v893 = vmul.f32 %v745, %v100
    %v894 = vmul.f32 %v749, %v101
    %v895 = vmul.f32 %v753, %v102
    %v896 = vmul.f32 %v757, %v103
    %v897 = vmul.f32 %v761, %v104
    %v898 = vmul.f32 %v765, %v105
    %v899 = vmul.f32 %v769, %v106
    %v900 = vmul.f32 %v773, %v107
    %v901 = vmul.f32 %v777, %v108
    %v902 = vmul.f32 %v781, %v109
    %v903 = vmul.f32 %v785, %v110
    %v904 = vmul.f32 %v789, %v111
    %v905 = vmul.f32 %v793, %v112
    %v906 = vmul.f32 %v797, %v113
    %v907 = vmul.f32 %v801, %v114
    %v908 = vmul.f32 %v805, %v115
    %v909 = vmul.f32 %v809, %v116
    %v910 = vmul.f32 %v813, %v117
    %v911 = vmul.f32 %v817, %v118
    %v912 = vmul.f32 %v821, %v119
    %v913 = vmul.f32 %v825, %v120
    %v914 = vmul.f32 %v829, %v121
    %v915 = vmul.f32 %v833, %v122
    %v916 = vmul.f32 %v837, %v123
    %v917 = vmul.f32 %v841, %v124
    %v918 = vmul.f32 %v845, %v125
    %v919 = vmul.f32 %v849, %v126
    %v920 = vmul.f32 %v853, %v127
    %v921 = vmul.f32 %v857, %v128
    %v922 = vadd.f32 %v890, %v891
    %v923 = vadd.f32 %v922, %v892
    %v924 = vadd.f32 %v923, %v893
    %v925 = vadd.f32 %v924, %v894
    %v926 = vadd.f32 %v925, %v895
    %v927 = vadd.f32 %v926, %v896
    %v928 = vadd.f32 %v927, %v897
    %v929 = vadd.f32 %v928, %v898
    %v930 = vadd.f32 %v929, %v899
    %v931 = vadd.f32 %v930, %v900
    %v932 = vadd.f32 %v931, %v901
    %v933 = vadd.f32 %v932, %v902
    %v934 = vadd.f32 %v933, %v903
    %v935 = vadd.f32 %v934, %v904
    %v936 = vadd.f32 %v935, %v905
    %v937 = vadd.f32 %v936, %v906
    %v938 = vadd.f32 %v937, %v907
    %v939 = vadd.f32 %v938, %v908
    %v940 = vadd.f32 %v939, %v909
    %v941 = vadd.f32 %v940, %v910
    %v942 = vadd.f32 %v941, %v911
    %v943 = vadd.f32 %v942, %v912
    %v944 = vadd.f32 %v943, %v913
    %v945 = vadd.f32 %v944, %v914
    %v946 = vadd.f32 %v945, %v915
    %v947 = vadd.f32 %v946, %v916
    %v948 = vadd.f32 %v947, %v917
    %v949 = vadd.f32 %v948, %v918
    %v950 = vadd.f32 %v949, %v919
    %v951 = vadd.f32 %v950, %v920
    %v952 = vadd.f32 %v951, %v921
    %v953 = vlaneseq
    %v954 = vshrl.u32 %v953, 7
    %v955 = vsub.s32 0, %v954
    %v956 = vrot.slane %v392, %v955
    %v957 = vlaneseq
    %v958 = vshrl.u32 %v957, 7
    %v959 = vsub.s32 0, %v958
    %v960 = vrot.slane %v406, %v959
    %v961 = vlaneseq
    %v962 = vshrl.u32 %v961, 7
    %v963 = vsub.s32 0, %v962
    %v964 = vrot.slane %v414, %v963
    %v965 = vlaneseq
    %v966 = vshrl.u32 %v965, 7
    %v967 = vsub.s32 0, %v966
    %v968 = vrot.slane %v416, %v967
    %v969 = vlaneseq
    %v970 = vshrl.u32 %v969, 7
    %v971 = vsub.s32 0, %v970
    %v972 = vrot.slane %v399, %v971
    %v973 = vlaneseq
    %v974 = vshrl.u32 %v973, 7
    %v975 = vsub.s32 0, %v974
    %v976 = vrot.slane %v413, %v975
    %v977 = vlaneseq
    %v978 = vshrl.u32 %v977, 7
    %v979 = vsub.s32 0, %v978
    %v980 = vrot.slane %v415, %v979
    %v981 = vlaneseq
    %v982 = vshrl.u32 %v981, 7
    %v983 = vsub.s32 0, %v982
    %v984 = vrot.slane %v417, %v983
    %v985 = vlaneseq
    %v986 = vshrl.u32 %v985, 7
    %v987 = vsub.s32 0, %v986
    %v988 = vrot.slane %v441, %v987
    %v989 = vlaneseq
    %v990 = vshrl.u32 %v989, 7
    %v991 = vsub.s32 0, %v990
    %v992 = vrot.slane %v455, %v991
    %v993 = vlaneseq
    %v994 = vshrl.u32 %v993, 7
    %v995 = vsub.s32 0, %v994
    %v996 = vrot.slane %v463, %v995
    %v997 = vlaneseq
    %v998 = vshrl.u32 %v997, 7
    %v999 = vsub.s32 0, %v998
    %v1000 = vrot.slane %v465, %v999
    %v1001 = vlaneseq
    %v1002 = vshrl.u32 %v1001, 7
    %v1003 = vsub.s32 0, %v1002
    %v1004 = vrot.slane %v448, %v1003
    %v1005 = vlaneseq
    %v1006 = vshrl.u32 %v1005, 7
    %v1007 = vsub.s32 0, %v1006
    %v1008 = vrot.slane %v462, %v1007
    %v1009 = vlaneseq
    %v1010 = vshrl.u32 %v1009, 7
    %v1011 = vsub.s32 0, %v1010
    %v1012 = vrot.slane %v464, %v1011
    %v1013 = vlaneseq
    %v1014 = vshrl.u32 %v1013, 7
    %v1015 = vsub.s32 0, %v1014
    %v1016 = vrot.slane %v466, %v1015
    %v1017 = vlaneseq
    %v1018 = vshrl.u32 %v1017, 7
    %v1019 = vsub.s32 0, %v1018
    %v1020 = vrot.slane %v490, %v1019
    %v1021 = vlaneseq
    %v1022 = vshrl.u32 %v1021, 7
    %v1023 = vsub.s32 0, %v1022
    %v1024 = vrot.slane %v504, %v1023
    %v1025 = vlaneseq
    %v1026 = vshrl.u32 %v1025, 7
    %v1027 = vsub.s32 0, %v1026
    %v1028 = vrot.slane %v512, %v1027
    %v1029 = vlaneseq
    %v1030 = vshrl.u32 %v1029, 7
    %v1031 = vsub.s32 0, %v1030
    %v1032 = vrot.slane %v514, %v1031
    %v1033 = vlaneseq
    %v1034 = vshrl.u32 %v1033, 7
    %v1035 = vsub.s32 0, %v1034
    %v1036 = vrot.slane %v497, %v1035
    %v1037 = vlaneseq
    %v1038 = vshrl.u32 %v1037, 7
    %v1039 = vsub.s32 0, %v1038
    %v1040 = vrot.slane %v511, %v1039
    %v1041 = vlaneseq
    %v1042 = vshrl.u32 %v1041, 7
    %v1043 = vsub.s32 0, %v1042
    %v1044 = vrot.slane %v513, %v1043
    %v1045 = vlaneseq
    %v1046 = vshrl.u32 %v1045, 7
    %v1047 = vsub.s32 0, %v1046
    %v1048 = vrot.slane %v515, %v1047
    %v1049 = vlaneseq
    %v1050 = vshrl.u32 %v1049, 7
    %v1051 = vsub.s32 0, %v1050
    %v1052 = vrot.slane %v539, %v1051
    %v1053 = vlaneseq
    %v1054 = vshrl.u32 %v1053, 7
    %v1055 = vsub.s32 0, %v1054
    %v1056 = vrot.slane %v553, %v1055
    %v1057 = vlaneseq
    %v1058 = vshrl.u32 %v1057, 7
    %v1059 = vsub.s32 0, %v1058
    %v1060 = vrot.slane %v561, %v1059
    %v1061 = vlaneseq
    %v1062 = vshrl.u32 %v1061, 7
    %v1063 = vsub.s32 0, %v1062
    %v1064 = vrot.slane %v563, %v1063
    %v1065 = vlaneseq
    %v1066 = vshrl.u32 %v1065, 7
    %v1067 = vsub.s32 0, %v1066
    %v1068 = vrot.slane %v546, %v1067
    %v1069 = vlaneseq
    %v1070 = vshrl.u32 %v1069, 7
    %v1071 = vsub.s32 0, %v1070
    %v1072 = vrot.slane %v560, %v1071
    %v1073 = vlaneseq
    %v1074 = vshrl.u32 %v1073, 7
    %v1075 = vsub.s32 0, %v1074
    %v1076 = vrot.slane %v562, %v1075
    %v1077 = vlaneseq
    %v1078 = vshrl.u32 %v1077, 7
    %v1079 = vsub.s32 0, %v1078
    %v1080 = vrot.slane %v564, %v1079
    %v1113 = vmul.f32 %v97, %v956
    %v1114 = vmul.f32 %v98, %v960
    %v1115 = vmul.f32 %v99, %v964
    %v1116 = vmul.f32 %v100, %v968
    %v1117 = vmul.f32 %v101, %v972
    %v1118 = vmul.f32 %v102, %v976
    %v1119 = vmul.f32 %v103, %v980
    %v1120 = vmul.f32 %v104, %v984
    %v1121 = vmul.f32 %v105, %v988
    %v1122 = vmul.f32 %v106, %v992
    %v1123 = vmul.f32 %v107, %v996
    %v1124 = vmul.f32 %v108, %v1000
    %v1125 = vmul.f32 %v109, %v1004
    %v1126 = vmul.f32 %v110, %v1008
    %v1127 = vmul.f32 %v111, %v1012
    %v1128 = vmul.f32 %v112, %v1016
    %v1129 = vmul.f32 %v113, %v1020
    %v1130 = vmul.f32 %v114, %v1024
    %v1131 = vmul.f32 %v115, %v1028
    %v1132 = vmul.f32 %v116, %v1032
    %v1133 = vmul.f32 %v117, %v1036
    %v1134 = vmul.f32 %v118, %v1040
    %v1135 = vmul.f32 %v119, %v1044
    %v1136 = vmul.f32 %v120, %v1048
    %v1137 = vmul.f32 %v121, %v1052
    %v1138 = vmul.f32 %v122, %v1056
    %v1139 = vmul.f32 %v123, %v1060
    %v1140 = vmul.f32 %v124, %v1064
    %v1141 = vmul.f32 %v125, %v1068
    %v1142 = vmul.f32 %v126, %v1072
    %v1143 = vmul.f32 %v127, %v1076
    %v1144 = vmul.f32 %v128, %v1080
    %v1145 = vadd.f32 %v1113, %v1114
    %v1146 = vadd.f32 %v1145, %v1115
    %v1147 = vadd.f32 %v1146, %v1116
    %v1148 = vadd.f32 %v1147, %v1117
    %v1149 = vadd.f32 %v1148, %v1118
    %v1150 = vadd.f32 %v1149, %v1119
    %v1151 = vadd.f32 %v1150, %v1120
    %v1152 = vadd.f32 %v1151, %v1121
    %v1153 = vadd.f32 %v1152, %v1122
    %v1154 = vadd.f32 %v1153, %v1123
    %v1155 = vadd.f32 %v1154, %v1124
    %v1156 = vadd.f32 %v1155, %v1125
    %v1157 = vadd.f32 %v1156, %v1126
    %v1158 = vadd.f32 %v1157, %v1127
    %v1159 = vadd.f32 %v1158, %v1128
    %v1160 = vadd.f32 %v1159, %v1129
    %v1161 = vadd.f32 %v1160, %v1130
    %v1162 = vadd.f32 %v1161, %v1131
    %v1163 = vadd.f32 %v1162, %v1132
    %v1164 = vadd.f32 %v1163, %v1133
    %v1165 = vadd.f32 %v1164, %v1134
    %v1166 = vadd.f32 %v1165, %v1135
    %v1167 = vadd.f32 %v1166, %v1136
    %v1168 = vadd.f32 %v1167, %v1137
    %v1169 = vadd.f32 %v1168, %v1138
    %v1170 = vadd.f32 %v1169, %v1139
    %v1171 = vadd.f32 %v1170, %v1140
    %v1172 = vadd.f32 %v1171, %v1141
    %v1173 = vadd.f32 %v1172, %v1142
    %v1174 = vadd.f32 %v1173, %v1143
    %v1175 = vadd.f32 %v1174, %v1144
    %v1176 = vmul.f32 %v733, %v129
    %v1177 = vmul.f32 %v737, %v130
    %v1178 = vmul.f32 %v741, %v131
    %v1179 = vmul.f32 %v745, %v132
    %v1180 = vmul.f32 %v749, %v133
    %v1181 = vmul.f32 %v753, %v134
    %v1182 = vmul.f32 %v757, %v135
    %v1183 = vmul.f32 %v761, %v136
    %v1184 = vmul.f32 %v765, %v137
    %v1185 = vmul.f32 %v769, %v138
    %v1186 = vmul.f32 %v773, %v139
    %v1187 = vmul.f32 %v777, %v140
    %v1188 = vmul.f32 %v781, %v141
    %v1189 = vmul.f32 %v785, %v142
    %v1190 = vmul.f32 %v789, %v143
    %v1191 = vmul.f32 %v793, %v144
    %v1192 = vmul.f32 %v797, %v145
    %v1193 = vmul.f32 %v801, %v146
    %v1194 = vmul.f32 %v805, %v147
    %v1195 = vmul.f32 %v809, %v148
    %v1196 = vmul.f32 %v813, %v149
    %v1197 = vmul.f32 %v817, %v150
    %v1198 = vmul.f32 %v821, %v151
    %v1199 = vmul.f32 %v825, %v152
    %v1200 = vmul.f32 %v829, %v153
    %v1201 = vmul.f32 %v833, %v154
    %v1202 = vmul.f32 %v837, %v155
    %v1203 = vmul.f32 %v841, %v156
    %v1204 = vmul.f32 %v845, %v157
    %v1205 = vmul.f32 %v849, %v158
    %v1206 = vmul.f32 %v853, %v159
    %v1207 = vmul.f32 %v857, %v160
    %v1208 = vadd.f32 %v1176, %v1177
    %v1209 = vadd.f32 %v1208, %v1178
    %v1210 = vadd.f32 %v1209, %v1179
    %v1211 = vadd.f32 %v1210, %v1180
    %v1212 = vadd.f32 %v1211, %v1181
    %v1213 = vadd.f32 %v1212, %v1182
    %v1214 = vadd.f32 %v1213, %v1183
    %v1215 = vadd.f32 %v1214, %v1184
    %v1216 = vadd.f32 %v1215, %v1185
    %v1217 = vadd.f32 %v1216, %v1186
    %v1218 = vadd.f32 %v1217, %v1187
    %v1219 = vadd.f32 %v1218, %v1188
    %v1220 = vadd.f32 %v1219, %v1189
    %v1221 = vadd.f32 %v1220, %v1190
    %v1222 = vadd.f32 %v1221, %v1191
    %v1223 = vadd.f32 %v1222, %v1192
    %v1224 = vadd.f32 %v1223, %v1193
    %v1225 = vadd.f32 %v1224, %v1194
    %v1226 = vadd.f32 %v1225, %v1195
    %v1227 = vadd.f32 %v1226, %v1196
    %v1228 = vadd.f32 %v1227, %v1197
    %v1229 = vadd.f32 %v1228, %v1198
    %v1230 = vadd.f32 %v1229, %v1199
    %v1231 = vadd.f32 %v1230, %v1200
    %v1232 = vadd.f32 %v1231, %v1201
    %v1233 = vadd.f32 %v1232, %v1202
    %v1234 = vadd.f32 %v1233, %v1203
    %v1235 = vadd.f32 %v1234, %v1204
    %v1236 = vadd.f32 %v1235, %v1205
    %v1237 = vadd.f32 %v1236, %v1206
    %v1238 = vadd.f32 %v1237, %v1207
    %v1239 = vmul.f32 %v952, 2.0
    %v1240 = vsub.f32 %v1239, %v577
    %v1241 = vsub.f32 %v1240, %v666
    %v1242 = vrot.slane %v1241, 4
    %v1243 = vmax.f32 %v1241, %v1242
    %v1244 = vrot.slane %v1243, 2
    %v1245 = vmax.f32 %v1243, %v1244
    %v1246 = vrot.slane %v1245, 1
    %v1247 = vmax.f32 %v1245, %v1246
    %v1248 = vsub.f32 %v1241, %v1247
    %v1249 = vmul.f32 %v1248, 1.442695
    %v1250 = vpow.pop %v1249
    %v1251 = vrot.slane %v1250, 4
    %v1252 = vadd.f32 %v1250, %v1251
    %v1253 = vrot.slane %v1252, 2
    %v1254 = vadd.f32 %v1252, %v1253
    %v1255 = vrot.slane %v1254, 1
    %v1256 = vadd.f32 %v1254, %v1255
    %v1257 = vrcp.pop %v1256
    %v1258 = vmul.f32 %v1250, %v1257
    %v1259 = vlaneseq
    %v1260 = vshrl.u32 %v1259, 7
    %v1261 = vsub.s32 0, %v1260
    %v1262 = vrot.slane %v162, %v1261
    %v1263 = vsub.f32 %v1262, %v163
    %v1264 = vand.u32 2147483647, %v1263
    %v1265 = vmul.f32 %v1258, %v164
    %v1266 = vlaneseq
    %v1267 = vshrl.u32 %v1266, 7
    %v1268 = vsub.s32 0, %v1267
    %v1269 = vrot.slane %v161, %v1268
    %v1270 = vmul.f32 %v1269, %v1264
    %v1271 = vmul.f32 %v1270, 1.442695
    %v1272 = vpow.pop %v1271
    %v1273 = vmul.f32 %v1265, %v1272
    %v1274 = vmul.f32 %v603, 2.0
    %v1275 = vsub.f32 %v1274, %v577
    %v1276 = vsub.f32 %v1275, %v590
    %v1277 = vmul.f32 %v1175, 2.0
    %v1278 = vsub.f32 %v1277, %v666
    %v1279 = vsub.f32 %v1278, %v590
    %v1280 = vmul.f32 %v1238, 2.0
    %v1281 = vsub.f32 %v1280, %v577
    %v1282 = vsub.f32 %v1281, %v729
    %v1283 = vmul.f32 %v1273, %v1279
    %v1284 = vrot.slane %v1283, 4
    %v1285 = vadd.f32 %v1283, %v1284
    %v1286 = vrot.slane %v1285, 2
    %v1287 = vadd.f32 %v1285, %v1286
    %v1288 = vrot.slane %v1287, 1
    %v1289 = vadd.f32 %v1287, %v1288
    %v1290 = vadd.f32 %v1276, %v1289
    %v1291 = vmul.f32 %v1273, %v97
    %v1292 = vmul.f32 %v1273, %v98
    %v1293 = vmul.f32 %v1273, %v99
    %v1294 = vmul.f32 %v1273, %v100
    %v1295 = vmul.f32 %v1273, %v101
    %v1296 = vmul.f32 %v1273, %v102
    %v1297 = vmul.f32 %v1273, %v103
    %v1298 = vmul.f32 %v1273, %v104
    %v1299 = vmul.f32 %v1273, %v105
    %v1300 = vmul.f32 %v1273, %v106
    %v1301 = vmul.f32 %v1273, %v107
    %v1302 = vmul.f32 %v1273, %v108
    %v1303 = vmul.f32 %v1273, %v109
    %v1304 = vmul.f32 %v1273, %v110
    %v1305 = vmul.f32 %v1273, %v111
    %v1306 = vmul.f32 %v1273, %v112
    %v1307 = vmul.f32 %v1273, %v113
    %v1308 = vmul.f32 %v1273, %v114
    %v1309 = vmul.f32 %v1273, %v115
    %v1310 = vmul.f32 %v1273, %v116
    %v1311 = vmul.f32 %v1273, %v117
    %v1312 = vmul.f32 %v1273, %v118
    %v1313 = vmul.f32 %v1273, %v119
    %v1314 = vmul.f32 %v1273, %v120
    %v1315 = vmul.f32 %v1273, %v121
    %v1316 = vmul.f32 %v1273, %v122
    %v1317 = vmul.f32 %v1273, %v123
    %v1318 = vmul.f32 %v1273, %v124
    %v1319 = vmul.f32 %v1273, %v125
    %v1320 = vmul.f32 %v1273, %v126
    %v1321 = vmul.f32 %v1273, %v127
    %v1322 = vmul.f32 %v1273, %v128
    %v1323 = vrot.slane %v1291, 4
    %v1324 = vadd.f32 %v1291, %v1323
    %v1325 = vrot.slane %v1324, 2
    %v1326 = vadd.f32 %v1324, %v1325
    %v1327 = vrot.slane %v1326, 1
    %v1328 = vadd.f32 %v1326, %v1327
    %v1329 = vrot.slane %v1292, 4
    %v1330 = vadd.f32 %v1292, %v1329
    %v1331 = vrot.slane %v1330, 2
    %v1332 = vadd.f32 %v1330, %v1331
    %v1333 = vrot.slane %v1332, 1
    %v1334 = vadd.f32 %v1332, %v1333
    %v1335 = vrot.slane %v1293, 4
    %v1336 = vadd.f32 %v1293, %v1335
    %v1337 = vrot.slane %v1336, 2
    %v1338 = vadd.f32 %v1336, %v1337
    %v1339 = vrot.slane %v1338, 1
    %v1340 = vadd.f32 %v1338, %v1339
    %v1341 = vrot.slane %v1294, 4
    %v1342 = vadd.f32 %v1294, %v1341
    %v1343 = vrot.slane %v1342, 2
    %v1344 = vadd.f32 %v1342, %v1343
    %v1345 = vrot.slane %v1344, 1
    %v1346 = vadd.f32 %v1344, %v1345
    %v1347 = vrot.slane %v1295, 4
    %v1348 = vadd.f32 %v1295, %v1347
    %v1349 = vrot.slane %v1348, 2
    %v1350 = vadd.f32 %v1348, %v1349
    %v1351 = vrot.slane %v1350, 1
    %v1352 = vadd.f32 %v1350, %v1351
    %v1353 = vrot.slane %v1296, 4
    %v1354 = vadd.f32 %v1296, %v1353
    %v1355 = vrot.slane %v1354, 2
    %v1356 = vadd.f32 %v1354, %v1355
    %v1357 = vrot.slane %v1356, 1
    %v1358 = vadd.f32 %v1356, %v1357
    %v1359 = vrot.slane %v1297, 4
    %v1360 = vadd.f32 %v1297, %v1359
    %v1361 = vrot.slane %v1360, 2
    %v1362 = vadd.f32 %v1360, %v1361
    %v1363 = vrot.slane %v1362, 1
    %v1364 = vadd.f32 %v1362, %v1363
    %v1365 = vrot.slane %v1298, 4
    %v1366 = vadd.f32 %v1298, %v1365
    %v1367 = vrot.slane %v1366, 2
    %v1368 = vadd.f32 %v1366, %v1367
    %v1369 = vrot.slane %v1368, 1
    %v1370 = vadd.f32 %v1368, %v1369
    %v1371 = vrot.slane %v1299, 4
    %v1372 = vadd.f32 %v1299, %v1371
    %v1373 = vrot.slane %v1372, 2
    %v1374 = vadd.f32 %v1372, %v1373
    %v1375 = vrot.slane %v1374, 1
    %v1376 = vadd.f32 %v1374, %v1375
    %v1377 = vrot.slane %v1300, 4
    %v1378 = vadd.f32 %v1300, %v1377
    %v1379 = vrot.slane %v1378, 2
    %v1380 = vadd.f32 %v1378, %v1379
    %v1381 = vrot.slane %v1380, 1
    %v1382 = vadd.f32 %v1380, %v1381
    %v1383 = vrot.slane %v1301, 4
    %v1384 = vadd.f32 %v1301, %v1383
    %v1385 = vrot.slane %v1384, 2
    %v1386 = vadd.f32 %v1384, %v1385
    %v1387 = vrot.slane %v1386, 1
    %v1388 = vadd.f32 %v1386, %v1387
    %v1389 = vrot.slane %v1302, 4
    %v1390 = vadd.f32 %v1302, %v1389
    %v1391 = vrot.slane %v1390, 2
    %v1392 = vadd.f32 %v1390, %v1391
    %v1393 = vrot.slane %v1392, 1
    %v1394 = vadd.f32 %v1392, %v1393
    %v1395 = vrot.slane %v1303, 4
    %v1396 = vadd.f32 %v1303, %v1395
    %v1397 = vrot.slane %v1396, 2
    %v1398 = vadd.f32 %v1396, %v1397
    %v1399 = vrot.slane %v1398, 1
    %v1400 = vadd.f32 %v1398, %v1399
    %v1401 = vrot.slane %v1304, 4
    %v1402 = vadd.f32 %v1304, %v1401
    %v1403 = vrot.slane %v1402, 2
    %v1404 = vadd.f32 %v1402, %v1403
    %v1405 = vrot.slane %v1404, 1
    %v1406 = vadd.f32 %v1404, %v1405
    %v1407 = vrot.slane %v1305, 4
    %v1408 = vadd.f32 %v1305, %v1407
    %v1409 = vrot.slane %v1408, 2
    %v1410 = vadd.f32 %v1408, %v1409
    %v1411 = vrot.slane %v1410, 1
    %v1412 = vadd.f32 %v1410, %v1411
    %v1413 = vrot.slane %v1306, 4
    %v1414 = vadd.f32 %v1306, %v1413
    %v1415 = vrot.slane %v1414, 2
    %v1416 = vadd.f32 %v1414, %v1415
    %v1417 = vrot.slane %v1416, 1
    %v1418 = vadd.f32 %v1416, %v1417
    %v1419 = vrot.slane %v1307, 4
    %v1420 = vadd.f32 %v1307, %v1419
    %v1421 = vrot.slane %v1420, 2
    %v1422 = vadd.f32 %v1420, %v1421
    %v1423 = vrot.slane %v1422, 1
    %v1424 = vadd.f32 %v1422, %v1423
    %v1425 = vrot.slane %v1308, 4
    %v1426 = vadd.f32 %v1308, %v1425
    %v1427 = vrot.slane %v1426, 2
    %v1428 = vadd.f32 %v1426, %v1427
    %v1429 = vrot.slane %v1428, 1
    %v1430 = vadd.f32 %v1428, %v1429
    %v1431 = vrot.slane %v1309, 4
    %v1432 = vadd.f32 %v1309, %v1431
    %v1433 = vrot.slane %v1432, 2
    %v1434 = vadd.f32 %v1432, %v1433
    %v1435 = vrot.slane %v1434, 1
    %v1436 = vadd.f32 %v1434, %v1435
    %v1437 = vrot.slane %v1310, 4
    %v1438 = vadd.f32 %v1310, %v1437
    %v1439 = vrot.slane %v1438, 2
    %v1440 = vadd.f32 %v1438, %v1439
    %v1441 = vrot.slane %v1440, 1
    %v1442 = vadd.f32 %v1440, %v1441
    %v1443 = vrot.slane %v1311, 4
    %v1444 = vadd.f32 %v1311, %v1443
    %v1445 = vrot.slane %v1444, 2
    %v1446 = vadd.f32 %v1444, %v1445
    %v1447 = vrot.slane %v1446, 1
    %v1448 = vadd.f32 %v1446, %v1447
    %v1449 = vrot.slane %v1312, 4
    %v1450 = vadd.f32 %v1312, %v1449
    %v1451 = vrot.slane %v1450, 2
    %v1452 = vadd.f32 %v1450, %v1451
    %v1453 = vrot.slane %v1452, 1
    %v1454 = vadd.f32 %v1452, %v1453
    %v1455 = vrot.slane %v1313, 4
    %v1456 = vadd.f32 %v1313, %v1455
    %v1457 = vrot.slane %v1456, 2
    %v1458 = vadd.f32 %v1456, %v1457
    %v1459 = vrot.slane %v1458, 1
    %v1460 = vadd.f32 %v1458, %v1459
    %v1461 = vrot.slane %v1314, 4
    %v1462 = vadd.f32 %v1314, %v1461
    %v1463 = vrot.slane %v1462, 2
    %v1464 = vadd.f32 %v1462, %v1463
    %v1465 = vrot.slane %v1464, 1
    %v1466 = vadd.f32 %v1464, %v1465
    %v1467 = vrot.slane %v1315, 4
    %v1468 = vadd.f32 %v1315, %v1467
    %v1469 = vrot.slane %v1468, 2
    %v1470 = vadd.f32 %v1468, %v1469
    %v1471 = vrot.slane %v1470, 1
    %v1472 = vadd.f32 %v1470, %v1471
    %v1473 = vrot.slane %v1316, 4
    %v1474 = vadd.f32 %v1316, %v1473
    %v1475 = vrot.slane %v1474, 2
    %v1476 = vadd.f32 %v1474, %v1475
    %v1477 = vrot.slane %v1476, 1
    %v1478 = vadd.f32 %v1476, %v1477
    %v1479 = vrot.slane %v1317, 4
    %v1480 = vadd.f32 %v1317, %v1479
    %v1481 = vrot.slane %v1480, 2
    %v1482 = vadd.f32 %v1480, %v1481
    %v1483 = vrot.slane %v1482, 1
    %v1484 = vadd.f32 %v1482, %v1483
    %v1485 = vrot.slane %v1318, 4
    %v1486 = vadd.f32 %v1318, %v1485
    %v1487 = vrot.slane %v1486, 2
    %v1488 = vadd.f32 %v1486, %v1487
    %v1489 = vrot.slane %v1488, 1
    %v1490 = vadd.f32 %v1488, %v1489
    %v1491 = vrot.slane %v1319, 4
    %v1492 = vadd.f32 %v1319, %v1491
    %v1493 = vrot.slane %v1492, 2
    %v1494 = vadd.f32 %v1492, %v1493
    %v1495 = vrot.slane %v1494, 1
    %v1496 = vadd.f32 %v1494, %v1495
    %v1497 = vrot.slane %v1320, 4
    %v1498 = vadd.f32 %v1320, %v1497
    %v1499 = vrot.slane %v1498, 2
    %v1500 = vadd.f32 %v1498, %v1499
    %v1501 = vrot.slane %v1500, 1
    %v1502 = vadd.f32 %v1500, %v1501
    %v1503 = vrot.slane %v1321, 4
    %v1504 = vadd.f32 %v1321, %v1503
    %v1505 = vrot.slane %v1504, 2
    %v1506 = vadd.f32 %v1504, %v1505
    %v1507 = vrot.slane %v1506, 1
    %v1508 = vadd.f32 %v1506, %v1507
    %v1509 = vrot.slane %v1322, 4
    %v1510 = vadd.f32 %v1322, %v1509
    %v1511 = vrot.slane %v1510, 2
    %v1512 = vadd.f32 %v1510, %v1511
    %v1513 = vrot.slane %v1512, 1
    %v1514 = vadd.f32 %v1512, %v1513
    %v1515 = vmul.f32 %v1328, %v129
    %v1516 = vmul.f32 %v1334, %v130
    %v1517 = vmul.f32 %v1340, %v131
    %v1518 = vmul.f32 %v1346, %v132
    %v1519 = vmul.f32 %v1352, %v133
    %v1520 = vmul.f32 %v1358, %v134
    %v1521 = vmul.f32 %v1364, %v135
    %v1522 = vmul.f32 %v1370, %v136
    %v1523 = vmul.f32 %v1376, %v137
    %v1524 = vmul.f32 %v1382, %v138
    %v1525 = vmul.f32 %v1388, %v139
    %v1526 = vmul.f32 %v1394, %v140
    %v1527 = vmul.f32 %v1400, %v141
    %v1528 = vmul.f32 %v1406, %v142
    %v1529 = vmul.f32 %v1412, %v143
    %v1530 = vmul.f32 %v1418, %v144
    %v1531 = vmul.f32 %v1424, %v145
    %v1532 = vmul.f32 %v1430, %v146
    %v1533 = vmul.f32 %v1436, %v147
    %v1534 = vmul.f32 %v1442, %v148
    %v1535 = vmul.f32 %v1448, %v149
    %v1536 = vmul.f32 %v1454, %v150
    %v1537 = vmul.f32 %v1460, %v151
    %v1538 = vmul.f32 %v1466, %v152
    %v1539 = vmul.f32 %v1472, %v153
    %v1540 = vmul.f32 %v1478, %v154
    %v1541 = vmul.f32 %v1484, %v155
    %v1542 = vmul.f32 %v1490, %v156
    %v1543 = vmul.f32 %v1496, %v157
    %v1544 = vmul.f32 %v1502, %v158
    %v1545 = vmul.f32 %v1508, %v159
    %v1546 = vmul.f32 %v1514, %v160
    %v1547 = vadd.f32 %v1515, %v1516
    %v1548 = vadd.f32 %v1547, %v1517
    %v1549 = vadd.f32 %v1548, %v1518
    %v1550 = vadd.f32 %v1549, %v1519
    %v1551 = vadd.f32 %v1550, %v1520
    %v1552 = vadd.f32 %v1551, %v1521
    %v1553 = vadd.f32 %v1552, %v1522
    %v1554 = vadd.f32 %v1553, %v1523
    %v1555 = vadd.f32 %v1554, %v1524
    %v1556 = vadd.f32 %v1555, %v1525
    %v1557 = vadd.f32 %v1556, %v1526
    %v1558 = vadd.f32 %v1557, %v1527
    %v1559 = vadd.f32 %v1558, %v1528
    %v1560 = vadd.f32 %v1559, %v1529
    %v1561 = vadd.f32 %v1560, %v1530
    %v1562 = vadd.f32 %v1561, %v1531
    %v1563 = vadd.f32 %v1562, %v1532
    %v1564 = vadd.f32 %v1563, %v1533
    %v1565 = vadd.f32 %v1564, %v1534
    %v1566 = vadd.f32 %v1565, %v1535
    %v1567 = vadd.f32 %v1566, %v1536
    %v1568 = vadd.f32 %v1567, %v1537
    %v1569 = vadd.f32 %v1568, %v1538
    %v1570 = vadd.f32 %v1569, %v1539
    %v1571 = vadd.f32 %v1570, %v1540
    %v1572 = vadd.f32 %v1571, %v1541
    %v1573 = vadd.f32 %v1572, %v1542
    %v1574 = vadd.f32 %v1573, %v1543
    %v1575 = vadd.f32 %v1574, %v1544
    %v1576 = vadd.f32 %v1575, %v1545
    %v1577 = vadd.f32 %v1576, %v1546
    %v1578 = vmul.f32 %v1273, %v666
    %v1579 = vrot.slane %v1578, 4
    %v1580 = vadd.f32 %v1578, %v1579
    %v1581 = vrot.slane %v1580, 2
    %v1582 = vadd.f32 %v1580, %v1581
    %v1583 = vrot.slane %v1582, 1
    %v1584 = vadd.f32 %v1582, %v1583
    %v1585 = vrot.slane %v1273, 4
    %v1586 = vadd.f32 %v1273, %v1585
    %v1587 = vrot.slane %v1586, 2
    %v1588 = vadd.f32 %v1586, %v1587
    %v1589 = vrot.slane %v1588, 1
    %v1590 = vadd.f32 %v1588, %v1589
    %v1591 = vmul.f32 %v1577, 2.0
    %v1592 = vadd.f32 %v1282, %v1591
    %v1593 = vsub.f32 %v1592, %v1584
    %v1594 = vmul.f32 %v1590, %v729
    %v1595 = vsub.f32 %v1593, %v1594
    %v1596 = vxor.u32 %v1290, 2147483648
    %v1597 = vmul.f32 %v1596, 1.442695
    %v1598 = vpow.pop %v1597
    %v1599 = vadd.f32 %v1598, 1.0
    %v1600 = vrcp.pop %v1599
    %v1601 = vmul.f32 1.0, %v1600
    %v1602 = vadd.f32 %v1601, 1e-06
    %v1603 = vlog2.pop %v1602
    %v1604 = vmul.f32 %v1603, 0.6931472
    %v1605 = vsub.f32 0.0, %v1604
    %v1606 = vsub.f32 0.0, %v1595
    %v1607 = vxor.u32 %v1606, 2147483648
    %v1608 = vmul.f32 %v1607, 1.442695
    %v1609 = vpow.pop %v1608
    %v1610 = vadd.f32 %v1609, 1.0
    %v1611 = vrcp.pop %v1610
    %v1612 = vmul.f32 1.0, %v1611
    %v1613 = vadd.f32 %v1612, 1e-06
    %v1614 = vlog2.pop %v1613
    %v1615 = vmul.f32 %v1614, 0.6931472
    %v1616 = vrot.slane %v1615, 4
    %v1617 = vadd.f32 %v1615, %v1616
    %v1618 = vrot.slane %v1617, 2
    %v1619 = vadd.f32 %v1617, %v1618
    %v1620 = vrot.slane %v1619, 1
    %v1621 = vadd.f32 %v1619, %v1620
    %v1622 = vsub.f32 %v1605, %v1621
    %1623 = vst [vmem:[#allocation11] sm:$0x1] %v1622
    // Predicated region
    $region42: #{tpu_custom_call.1} parent=1 // pred_check
      _
    $region43: #{tpu_custom_call.1} parent=1 // pred_check_branch
      %1625 = sbr.rel (0) target = $region45
    $region44: #{tpu_custom_call.1} parent=1 // pred_region
      %s1627 = ssub.s32 16, 16
      %1628 = vsyncadd [#allocation4], %s1627
      %s1630 = sshll.u32 [#allocation11], 4
      %s1631 = int_to_ptr.vmem [resolvable:$true] %s1630
      %1633 = dma.vmem_to_hbm [thread:$0]  %s1631, 16, %s5, [#allocation4]
    $region45: #{tpu_custom_call.1} parent=1 // pred_fallthru
      _
    // Predicated region
    $region46: #{tpu_custom_call.1} parent=1 // pred_check
      _
    $region47: #{tpu_custom_call.1} parent=1 // pred_check_branch
      %1635 = sbr.rel (0) target = $region49
    $region48: #{tpu_custom_call.1} parent=1 // pred_region
      %1636 = dma.done [#allocation4], 16
    $region49: #{tpu_custom_call.1} parent=1 // pred_fallthru
      _
    %1637 = vsyncpa [#allocation3], 1
    %1638 = vsyncpa [#allocation6], 1
    %1639 = vsyncpa [#allocation9], 1
    %1640 = vsyncpa [#allocation4], 1

</llo_original>
